<compile_context>
chip_gen: v7x
topology: tpu7x:2x2x1
jax: 0.10.0
libtpu: 0.0.40
codegen_flags: <defaults>
</compile_context>

<pallas_src>
import math

import jax
import jax.numpy as jnp
from jax.experimental import pallas as pl
from jax.experimental.pallas import tpu as pltpu


def make_encoder_kernel(S, D, H, F, eps=1e-6, compute_dtype=jnp.bfloat16):
    DK = D // H
    inv_sqrt_dk = 1.0 / math.sqrt(DK)
    # EUP (approx) reciprocals only on the low-precision fast path so the f32
    # path stays numerically faithful to the reference (1e-4 tolerance).
    approx = (compute_dtype == jnp.bfloat16)

    def kernel(x_ref, mask_ref,
               wq_ref, bq_ref, wv_ref, bv_ref,
               wo_ref, bo_ref, w1_ref, b1_ref, w2_ref, b2_ref,
               ln_ref, o_ref):
        # LayerNorm scalar affine params (alpha, bias) live in SMEM.
        alpha = ln_ref[0]
        beta = ln_ref[1]

        x = x_ref[...].astype(jnp.float32)                 # (S, D) residual stream

        def layer_norm(t):
            mean = jnp.mean(t, axis=-1, keepdims=True)
            # torch.std default is unbiased (divides by N-1); eps added to std.
            var = jnp.sum((t - mean) ** 2, axis=-1, keepdims=True) / (D - 1)
            inv = pl.reciprocal(jnp.sqrt(var) + eps, approx=approx)
            return (alpha * inv) * (t - mean) + beta

        # ---------- residual connection [0]: self-attention sublayer ----------
        xn = layer_norm(x).astype(compute_dtype)
        q = jnp.dot(xn, wq_ref[...], preferred_element_type=jnp.float32) + bq_ref[...]
        # NOTE: w_k/b_k are never used because the source overwrites key with
        # the reshaped *query* projection (bug reproduced below: kh = qh).
        v = jnp.dot(xn, wv_ref[...], preferred_element_type=jnp.float32) + bv_ref[...]

        # head-batched layout: one relayout, no per-head lane slicing
        qh = jnp.transpose(q.reshape(S, H, DK), (1, 0, 2))          # (H, S, DK)
        vh = jnp.transpose(v.reshape(S, H, DK), (1, 0, 2)).astype(compute_dtype)
        kh = qh.astype(compute_dtype)                                # key == query (bug)
        qh = (qh * inv_sqrt_dk).astype(compute_dtype)                # scale q once

        s = jnp.einsum('hqd,hkd->hqk', qh, kh,
                       preferred_element_type=jnp.float32)           # (H, S, S)

        # additive mask bias computed once, shared across all heads
        bias = jnp.where(mask_ref[...] == 0,
                         jnp.float32(-1e9), jnp.float32(0.0))        # (S, S)
        s = s + bias[None, :, :]

        # numerically stable softmax over the key axis
        m = jnp.max(s, axis=-1, keepdims=True)
        e = jnp.exp(s - m)
        p = e * pl.reciprocal(jnp.sum(e, axis=-1, keepdims=True), approx=approx)
        # dropout on attention probs: identity in eval mode

        a = jnp.einsum('hqk,hkd->hqd', p.astype(compute_dtype), vh,
                       preferred_element_type=jnp.float32)           # (H, S, DK)
        a2 = jnp.transpose(a, (1, 0, 2)).reshape(S, D)                # concat heads

        # single K=D output projection (MXU-friendly), not H small K=DK matmuls
        attn = jnp.dot(a2.astype(compute_dtype), wo_ref[...],
                       preferred_element_type=jnp.float32) + bo_ref[...]
        x = x + attn                                                  # residual add

        # -------- residual connection [0] again (as written in the module):
        # -------- feed-forward sublayer ---------------------------------------
        xn2 = layer_norm(x).astype(compute_dtype)
        h1 = jnp.dot(xn2, w1_ref[...], preferred_element_type=jnp.float32) + b1_ref[...]
        h1 = jnp.maximum(h1, 0.0).astype(compute_dtype)               # relu; dropout == identity
        ff = jnp.dot(h1, w2_ref[...], preferred_element_type=jnp.float32) + b2_ref[...]

        o_ref[...] = (x + ff).astype(o_ref.dtype)

    return kernel


def encoder_block_forward(x, src_mask, params, h, compute_dtype=jnp.bfloat16):
    """x: (B, S, d_model) f32; src_mask broadcastable to (B, 1, S, S) (nonzero == keep)."""
    B, S, D = x.shape
    F = params['w1'].shape[0]
    assert D % h == 0

    kernel = make_encoder_kernel(S, D, h, F, compute_dtype=compute_dtype)

    cd = compute_dtype
    # mask is identical across heads in this module usage -> pass (B, S, S)
    mask3 = jnp.broadcast_to(src_mask, (B, 1, S, S))[:, 0].astype(cd)

    args = (
        x.astype(jnp.float32), mask3,
        # PyTorch nn.Linear stores (out, in); transpose to (in, out) for x @ W.
        params['w_q'].T.astype(cd), params['b_q'].reshape(1, D).astype(jnp.float32),
        params['w_v'].T.astype(cd), params['b_v'].reshape(1, D).astype(jnp.float32),
        params['w_o'].T.astype(cd), params['b_o'].reshape(1, D).astype(jnp.float32),
        params['w1'].T.astype(cd), params['b1'].reshape(1, F).astype(jnp.float32),
        params['w2'].T.astype(cd), params['b2'].reshape(1, D).astype(jnp.float32),
        jnp.array([1.0, 0.0], jnp.float32),   # LayerNormalisation (alpha, bias)
    )

    # Per-batch-element activation/mask/output tiles (grid axis "parallel" ->
    # both TensorCores on v7x); weights resident via constant block indices.
    def act(shape):
        return pl.BlockSpec((None,) + shape, lambda b: (b, 0, 0))

    def resident(shape):
        nd = len(shape)
        return pl.BlockSpec(shape, lambda b: (0,) * nd)

    in_specs = [
        act((S, D)),                                       # x
        act((S, S)),                                       # mask
        resident((D, D)), resident((1, D)),                # w_q, b_q
        resident((D, D)), resident((1, D)),                # w_v, b_v
        resident((D, D)), resident((1, D)),                # w_o, b_o
        resident((D, F)), resident((1, F)),                # w1, b1
        resident((F, D)), resident((1, D)),                # w2, b2
        pl.BlockSpec(memory_space=pltpu.MemorySpace.SMEM), # layernorm scalars
    ]

    return pl.pallas_call(
        kernel,
        out_shape=jax.ShapeDtypeStruct((B, S, D), jnp.float32),
        grid_spec=pltpu.PrefetchScalarGridSpec(
            num_scalar_prefetch=0,
            grid=(B,),
            in_specs=in_specs,
            out_specs=act((S, D)),
        ),
        compiler_params=pltpu.CompilerParams(
            dimension_semantics=("parallel",),
            vmem_limit_bytes=64 * 1024 * 1024,
        ),
    )(*args)


def encoder_block_ref(x, src_mask, p, h):
    """Pure-JAX reference with identical semantics (incl. the key<-query bug)."""
    B, S, D = x.shape
    DK = D // h
    eps = 1e-6

    def ln(t):
        mean = t.mean(-1, keepdims=True)
        std = jnp.sqrt(((t - mean) ** 2).sum(-1, keepdims=True) / (D - 1))
        return 1.0 * (t - mean) / (std + eps) + 0.0

    xn = ln(x)
    q = xn @ p['w_q'].T + p['b_q']
    v = xn @ p['w_v'].T + p['b_v']
    q4 = q.reshape(B, S, h, DK).transpose(0, 2, 1, 3)
    k4 = q4                                   # key == query (bug)
    v4 = v.reshape(B, S, h, DK).transpose(0, 2, 1, 3)
    s = jnp.einsum('bhqd,bhkd->bhqk', q4, k4) / math.sqrt(DK)
    s = jnp.where(src_mask == 0, -1e9, s)
    a = jax.nn.softmax(s, axis=-1)
    o = jnp.einsum('bhqk,bhkd->bhqd', a, v4).transpose(0, 2, 1, 3).reshape(B, S, D)
    x = x + (o @ p['w_o'].T + p['b_o'])

    xn = ln(x)
    ff = jnp.maximum(xn @ p['w1'].T + p['b1'], 0.0) @ p['w2'].T + p['b2']
    return x + ff


if __name__ == "__main__":
    B, S, D, H, F = 2, 8, 32, 4, 64  # batch, seq, d_model, heads, d_ff

    key = jax.random.PRNGKey(0)
    ks = jax.random.split(key, 16)
    sc = 0.1
    params = {
        'w_q': jax.random.normal(ks[0], (D, D), jnp.float32) * sc,
        'b_q': jax.random.normal(ks[1], (D,), jnp.float32) * sc,
        'w_k': jax.random.normal(ks[2], (D, D), jnp.float32) * sc,
        'b_k': jax.random.normal(ks[3], (D,), jnp.float32) * sc,
        'w_v': jax.random.normal(ks[4], (D, D), jnp.float32) * sc,
        'b_v': jax.random.normal(ks[5], (D,), jnp.float32) * sc,
        'w_o': jax.random.normal(ks[6], (D, D), jnp.float32) * sc,
        'b_o': jax.random.normal(ks[7], (D,), jnp.float32) * sc,
        'w1': jax.random.normal(ks[8], (F, D), jnp.float32) * sc,
        'b1': jax.random.normal(ks[9], (F,), jnp.float32) * sc,
        'w2': jax.random.normal(ks[10], (D, F), jnp.float32) * sc,
        'b2': jax.random.normal(ks[11], (D,), jnp.float32) * sc,
    }

    x = jax.random.normal(ks[12], (B, S, D), jnp.float32)
    # causal-style mask (exercises the masked_fill path), broadcast over heads
    src_mask = jnp.tril(jnp.ones((S, S), jnp.float32))[None, None]
    src_mask = jnp.broadcast_to(src_mask, (B, 1, S, S))

    ref = encoder_block_ref(x, src_mask, params, H)

    # exact path (f32 MXU operands, exact reciprocals): tight tolerance
    out_f32 = encoder_block_forward(x, src_mask, params, H, compute_dtype=jnp.float32)
    jax.block_until_ready(out_f32)
    assert out_f32.shape == (B, S, D), out_f32.shape
    err32 = float(jnp.max(jnp.abs(out_f32 - ref)))
    assert jnp.allclose(out_f32, ref, atol=1e-4, rtol=1e-4), f"f32 max abs err = {err32}"

    # fast path (bf16 MXU operands, f32 accumulation, EUP reciprocals)
    out_bf16 = encoder_block_forward(x, src_mask, params, H, compute_dtype=jnp.bfloat16)
    jax.block_until_ready(out_bf16)
    errbf = float(jnp.max(jnp.abs(out_bf16 - ref)))
    assert jnp.allclose(out_bf16, ref, atol=5e-2, rtol=5e-2), f"bf16 max abs err = {errbf}"

    print("KERNEL_OK")
</pallas_src>

<mosaic_0001>
module attributes {stable_mosaic.version = 11 : i64} {
  func.func @kernel(%arg0: i32, %arg1: memref<1x8x32xf32, #tpu.memory_space<vmem>>, %arg2: memref<1x8x8xf32, #tpu.memory_space<vmem>>, %arg3: memref<32x32xf32, #tpu.memory_space<vmem>>, %arg4: memref<1x32xf32, #tpu.memory_space<vmem>>, %arg5: memref<32x32xf32, #tpu.memory_space<vmem>>, %arg6: memref<1x32xf32, #tpu.memory_space<vmem>>, %arg7: memref<32x32xf32, #tpu.memory_space<vmem>>, %arg8: memref<1x32xf32, #tpu.memory_space<vmem>>, %arg9: memref<32x64xf32, #tpu.memory_space<vmem>>, %arg10: memref<1x64xf32, #tpu.memory_space<vmem>>, %arg11: memref<64x32xf32, #tpu.memory_space<vmem>>, %arg12: memref<1x32xf32, #tpu.memory_space<vmem>>, %arg13: memref<2xf32, #tpu.memory_space<smem>>, %arg14: memref<1x8x32xf32, #tpu.memory_space<vmem>>) attributes {dimension_semantics = [#tpu.dimension_semantics<parallel>], iteration_bounds = array<i64: 2>, scalar_prefetch = 0 : i64, scratch_operands = 0 : i64, tpu.core_type = #tpu.core_type<tc>, window_params = [{transform_indices = @transform_0, window_bounds = array<i64: 1, 8, 32>}, {transform_indices = @transform_1, window_bounds = array<i64: 1, 8, 8>}, {pipeline_mode = #tpu.pipeline_mode<synchronous>, transform_indices = @transform_2, window_bounds = array<i64: 32, 32>}, {pipeline_mode = #tpu.pipeline_mode<synchronous>, transform_indices = @transform_3, window_bounds = array<i64: 1, 32>}, {pipeline_mode = #tpu.pipeline_mode<synchronous>, transform_indices = @transform_4, window_bounds = array<i64: 32, 32>}, {pipeline_mode = #tpu.pipeline_mode<synchronous>, transform_indices = @transform_5, window_bounds = array<i64: 1, 32>}, {pipeline_mode = #tpu.pipeline_mode<synchronous>, transform_indices = @transform_6, window_bounds = array<i64: 32, 32>}, {pipeline_mode = #tpu.pipeline_mode<synchronous>, transform_indices = @transform_7, window_bounds = array<i64: 1, 32>}, {pipeline_mode = #tpu.pipeline_mode<synchronous>, transform_indices = @transform_8, window_bounds = array<i64: 32, 64>}, {pipeline_mode = #tpu.pipeline_mode<synchronous>, transform_indices = @transform_9, window_bounds = array<i64: 1, 64>}, {pipeline_mode = #tpu.pipeline_mode<synchronous>, transform_indices = @transform_10, window_bounds = array<i64: 64, 32>}, {pipeline_mode = #tpu.pipeline_mode<synchronous>, transform_indices = @transform_11, window_bounds = array<i64: 1, 32>}, {transform_indices = @transform_12, window_bounds = array<i64: 2>}, {transform_indices = @transform_13, window_bounds = array<i64: 1, 8, 32>}]} {
    %c0 = arith.constant 0 : index
    %0 = memref.load %arg13[%c0] : memref<2xf32, #tpu.memory_space<smem>>
    %c1 = arith.constant 1 : index
    %1 = memref.load %arg13[%c1] : memref<2xf32, #tpu.memory_space<smem>>
    %c0_0 = arith.constant 0 : index
    %c0_1 = arith.constant 0 : index
    %c0_2 = arith.constant 0 : index
    %2 = vector.load %arg1[%c0_0, %c0_1, %c0_2] : memref<1x8x32xf32, #tpu.memory_space<vmem>>, vector<1x8x32xf32>
    %3 = vector.shape_cast %2 : vector<1x8x32xf32> to vector<8x32xf32>
    %cst = arith.constant dense<0.000000e+00> : vector<8xf32>
    %4 = vector.multi_reduction <add>, %3, %cst [1] : vector<8x32xf32> to vector<8xf32>
    %5 = vector.shape_cast %4 : vector<8xf32> to vector<8x1xf32>
    %cst_3 = arith.constant 3.200000e+01 : f32
    %6 = vector.broadcast %cst_3 : f32 to vector<8x1xf32>
    %7 = arith.divf %5, %6 : vector<8x1xf32>
    %8 = vector.broadcast %7 : vector<8x1xf32> to vector<8x32xf32>
    %9 = arith.subf %3, %8 : vector<8x32xf32>
    %10 = arith.mulf %9, %9 : vector<8x32xf32>
    %cst_4 = arith.constant dense<0.000000e+00> : vector<8xf32>
    %11 = vector.multi_reduction <add>, %10, %cst_4 [1] : vector<8x32xf32> to vector<8xf32>
    %12 = vector.shape_cast %11 : vector<8xf32> to vector<8x1xf32>
    %cst_5 = arith.constant 3.100000e+01 : f32
    %13 = vector.broadcast %cst_5 : f32 to vector<8x1xf32>
    %14 = arith.divf %12, %13 : vector<8x1xf32>
    %15 = math.sqrt %14 : vector<8x1xf32>
    %cst_6 = arith.constant 9.99999997E-7 : f32
    %16 = vector.broadcast %cst_6 : f32 to vector<8x1xf32>
    %17 = arith.addf %15, %16 : vector<8x1xf32>
    %18 = tpu.reciprocal %17 : vector<8x1xf32> -> vector<8x1xf32>
    %19 = vector.broadcast %0 : f32 to vector<8x1xf32>
    %20 = arith.mulf %19, %18 : vector<8x1xf32>
    %21 = vector.broadcast %7 : vector<8x1xf32> to vector<8x32xf32>
    %22 = arith.subf %3, %21 : vector<8x32xf32>
    %23 = vector.broadcast %20 : vector<8x1xf32> to vector<8x32xf32>
    %24 = arith.mulf %23, %22 : vector<8x32xf32>
    %25 = vector.broadcast %1 : f32 to vector<8x32xf32>
    %26 = arith.addf %24, %25 : vector<8x32xf32>
    %c0_7 = arith.constant 0 : index
    %c0_8 = arith.constant 0 : index
    %27 = vector.load %arg3[%c0_7, %c0_8] : memref<32x32xf32, #tpu.memory_space<vmem>>, vector<32x32xf32>
    %cst_9 = arith.constant dense<0.000000e+00> : vector<8x32xf32>
    %28 = tpu.matmul %26, %27, %cst_9 {dimension_numbers = #tpu.dot_dimension_numbers<[1], [0], [0], [1], [0, 0, 1, 1], [], []>} : vector<8x32xf32>, vector<32x32xf32>, vector<8x32xf32> -> vector<8x32xf32>
    %c0_10 = arith.constant 0 : index
    %c0_11 = arith.constant 0 : index
    %29 = vector.load %arg4[%c0_10, %c0_11] : memref<1x32xf32, #tpu.memory_space<vmem>>, vector<1x32xf32>
    %30 = vector.broadcast %29 : vector<1x32xf32> to vector<8x32xf32>
    %31 = arith.addf %28, %30 : vector<8x32xf32>
    %c0_12 = arith.constant 0 : index
    %c0_13 = arith.constant 0 : index
    %32 = vector.load %arg5[%c0_12, %c0_13] : memref<32x32xf32, #tpu.memory_space<vmem>>, vector<32x32xf32>
    %cst_14 = arith.constant dense<0.000000e+00> : vector<8x32xf32>
    %33 = tpu.matmul %26, %32, %cst_14 {dimension_numbers = #tpu.dot_dimension_numbers<[1], [0], [0], [1], [0, 0, 1, 1], [], []>} : vector<8x32xf32>, vector<32x32xf32>, vector<8x32xf32> -> vector<8x32xf32>
    %c0_15 = arith.constant 0 : index
    %c0_16 = arith.constant 0 : index
    %34 = vector.load %arg6[%c0_15, %c0_16] : memref<1x32xf32, #tpu.memory_space<vmem>>, vector<1x32xf32>
    %35 = vector.broadcast %34 : vector<1x32xf32> to vector<8x32xf32>
    %36 = arith.addf %33, %35 : vector<8x32xf32>
    %37 = vector.shape_cast %31 : vector<8x32xf32> to vector<8x4x8xf32>
    %38 = tpu.transpose %37, [1, 0, 2] : vector<8x4x8xf32> -> vector<4x8x8xf32>
    %39 = vector.shape_cast %36 : vector<8x32xf32> to vector<8x4x8xf32>
    %40 = tpu.transpose %39, [1, 0, 2] : vector<8x4x8xf32> -> vector<4x8x8xf32>
    %cst_17 = arith.constant 0.353553385 : f32
    %41 = vector.broadcast %cst_17 : f32 to vector<4x8x8xf32>
    %42 = arith.mulf %38, %41 : vector<4x8x8xf32>
    "tpu.trace_start"() <{level = 10 : i32, message = "hqd,hkd->hqk"}> : () -> ()
    %cst_18 = arith.constant dense<0.000000e+00> : vector<4x8x8xf32>
    %43 = tpu.matmul %42, %38, %cst_18 {dimension_numbers = #tpu.dot_dimension_numbers<[2], [2], [1], [1], [0, 0, 0, 1, 1, 1], [0], [0]>} : vector<4x8x8xf32>, vector<4x8x8xf32>, vector<4x8x8xf32> -> vector<4x8x8xf32>
    "tpu.trace_stop"() : () -> ()
    %c0_19 = arith.constant 0 : index
    %c0_20 = arith.constant 0 : index
    %c0_21 = arith.constant 0 : index
    %44 = vector.load %arg2[%c0_19, %c0_20, %c0_21] : memref<1x8x8xf32, #tpu.memory_space<vmem>>, vector<1x8x8xf32>
    %45 = vector.shape_cast %44 : vector<1x8x8xf32> to vector<8x8xf32>
    %cst_22 = arith.constant 0.000000e+00 : f32
    %46 = vector.broadcast %cst_22 : f32 to vector<8x8xf32>
    %47 = arith.cmpf oeq, %45, %46 : vector<8x8xf32>
    %cst_23 = arith.constant -1.000000e+09 : f32
    %cst_24 = arith.constant 0.000000e+00 : f32
    %48 = vector.broadcast %cst_23 : f32 to vector<8x8xf32>
    %49 = vector.broadcast %cst_24 : f32 to vector<8x8xf32>
    %50 = arith.select %47, %48, %49 : vector<8x8xi1>, vector<8x8xf32>
    %51 = vector.shape_cast %50 : vector<8x8xf32> to vector<1x8x8xf32>
    %52 = vector.broadcast %51 : vector<1x8x8xf32> to vector<4x8x8xf32>
    %53 = arith.addf %43, %52 : vector<4x8x8xf32>
    %cst_25 = arith.constant dense<0xFF800000> : vector<4x8xf32>
    %54 = vector.multi_reduction <maximumf>, %53, %cst_25 [2] : vector<4x8x8xf32> to vector<4x8xf32>
    %55 = vector.shape_cast %54 : vector<4x8xf32> to vector<4x8x1xf32>
    %56 = vector.broadcast %55 : vector<4x8x1xf32> to vector<4x8x8xf32>
    %57 = arith.subf %53, %56 : vector<4x8x8xf32>
    %58 = math.exp %57 : vector<4x8x8xf32>
    %cst_26 = arith.constant dense<0.000000e+00> : vector<4x8xf32>
    %59 = vector.multi_reduction <add>, %58, %cst_26 [2] : vector<4x8x8xf32> to vector<4x8xf32>
    %60 = vector.shape_cast %59 : vector<4x8xf32> to vector<4x8x1xf32>
    %61 = tpu.reciprocal %60 : vector<4x8x1xf32> -> vector<4x8x1xf32>
    %62 = vector.broadcast %61 : vector<4x8x1xf32> to vector<4x8x8xf32>
    %63 = arith.mulf %58, %62 : vector<4x8x8xf32>
    "tpu.trace_start"() <{level = 10 : i32, message = "hqk,hkd->hqd"}> : () -> ()
    %cst_27 = arith.constant dense<0.000000e+00> : vector<4x8x8xf32>
    %64 = tpu.matmul %63, %40, %cst_27 {dimension_numbers = #tpu.dot_dimension_numbers<[2], [1], [1], [2], [0, 0, 0, 1, 1, 2], [0], [0]>} : vector<4x8x8xf32>, vector<4x8x8xf32>, vector<4x8x8xf32> -> vector<4x8x8xf32>
    "tpu.trace_stop"() : () -> ()
    %65 = tpu.transpose %64, [1, 0, 2] : vector<4x8x8xf32> -> vector<8x4x8xf32>
    %66 = vector.shape_cast %65 : vector<8x4x8xf32> to vector<8x32xf32>
    %c0_28 = arith.constant 0 : index
    %c0_29 = arith.constant 0 : index
    %67 = vector.load %arg7[%c0_28, %c0_29] : memref<32x32xf32, #tpu.memory_space<vmem>>, vector<32x32xf32>
    %cst_30 = arith.constant dense<0.000000e+00> : vector<8x32xf32>
    %68 = tpu.matmul %66, %67, %cst_30 {dimension_numbers = #tpu.dot_dimension_numbers<[1], [0], [0], [1], [0, 0, 1, 1], [], []>} : vector<8x32xf32>, vector<32x32xf32>, vector<8x32xf32> -> vector<8x32xf32>
    %c0_31 = arith.constant 0 : index
    %c0_32 = arith.constant 0 : index
    %69 = vector.load %arg8[%c0_31, %c0_32] : memref<1x32xf32, #tpu.memory_space<vmem>>, vector<1x32xf32>
    %70 = vector.broadcast %69 : vector<1x32xf32> to vector<8x32xf32>
    %71 = arith.addf %68, %70 : vector<8x32xf32>
    %72 = arith.addf %3, %71 : vector<8x32xf32>
    %cst_33 = arith.constant dense<0.000000e+00> : vector<8xf32>
    %73 = vector.multi_reduction <add>, %72, %cst_33 [1] : vector<8x32xf32> to vector<8xf32>
    %74 = vector.shape_cast %73 : vector<8xf32> to vector<8x1xf32>
    %cst_34 = arith.constant 3.200000e+01 : f32
    %75 = vector.broadcast %cst_34 : f32 to vector<8x1xf32>
    %76 = arith.divf %74, %75 : vector<8x1xf32>
    %77 = vector.broadcast %76 : vector<8x1xf32> to vector<8x32xf32>
    %78 = arith.subf %72, %77 : vector<8x32xf32>
    %79 = arith.mulf %78, %78 : vector<8x32xf32>
    %cst_35 = arith.constant dense<0.000000e+00> : vector<8xf32>
    %80 = vector.multi_reduction <add>, %79, %cst_35 [1] : vector<8x32xf32> to vector<8xf32>
    %81 = vector.shape_cast %80 : vector<8xf32> to vector<8x1xf32>
    %cst_36 = arith.constant 3.100000e+01 : f32
    %82 = vector.broadcast %cst_36 : f32 to vector<8x1xf32>
    %83 = arith.divf %81, %82 : vector<8x1xf32>
    %84 = math.sqrt %83 : vector<8x1xf32>
    %cst_37 = arith.constant 9.99999997E-7 : f32
    %85 = vector.broadcast %cst_37 : f32 to vector<8x1xf32>
    %86 = arith.addf %84, %85 : vector<8x1xf32>
    %87 = tpu.reciprocal %86 : vector<8x1xf32> -> vector<8x1xf32>
    %88 = vector.broadcast %0 : f32 to vector<8x1xf32>
    %89 = arith.mulf %88, %87 : vector<8x1xf32>
    %90 = vector.broadcast %76 : vector<8x1xf32> to vector<8x32xf32>
    %91 = arith.subf %72, %90 : vector<8x32xf32>
    %92 = vector.broadcast %89 : vector<8x1xf32> to vector<8x32xf32>
    %93 = arith.mulf %92, %91 : vector<8x32xf32>
    %94 = vector.broadcast %1 : f32 to vector<8x32xf32>
    %95 = arith.addf %93, %94 : vector<8x32xf32>
    %c0_38 = arith.constant 0 : index
    %c0_39 = arith.constant 0 : index
    %96 = vector.load %arg9[%c0_38, %c0_39] : memref<32x64xf32, #tpu.memory_space<vmem>>, vector<32x64xf32>
    %cst_40 = arith.constant dense<0.000000e+00> : vector<8x64xf32>
    %97 = tpu.matmul %95, %96, %cst_40 {dimension_numbers = #tpu.dot_dimension_numbers<[1], [0], [0], [1], [0, 0, 1, 1], [], []>} : vector<8x32xf32>, vector<32x64xf32>, vector<8x64xf32> -> vector<8x64xf32>
    %c0_41 = arith.constant 0 : index
    %c0_42 = arith.constant 0 : index
    %98 = vector.load %arg10[%c0_41, %c0_42] : memref<1x64xf32, #tpu.memory_space<vmem>>, vector<1x64xf32>
    %99 = vector.broadcast %98 : vector<1x64xf32> to vector<8x64xf32>
    %100 = arith.addf %97, %99 : vector<8x64xf32>
    %cst_43 = arith.constant 0.000000e+00 : f32
    %101 = vector.broadcast %cst_43 : f32 to vector<8x64xf32>
    %102 = arith.maximumf %100, %101 : vector<8x64xf32>
    %c0_44 = arith.constant 0 : index
    %c0_45 = arith.constant 0 : index
    %103 = vector.load %arg11[%c0_44, %c0_45] : memref<64x32xf32, #tpu.memory_space<vmem>>, vector<64x32xf32>
    %cst_46 = arith.constant dense<0.000000e+00> : vector<8x32xf32>
    %104 = tpu.matmul %102, %103, %cst_46 {dimension_numbers = #tpu.dot_dimension_numbers<[1], [0], [0], [1], [0, 0, 1, 1], [], []>} : vector<8x64xf32>, vector<64x32xf32>, vector<8x32xf32> -> vector<8x32xf32>
    %c0_47 = arith.constant 0 : index
    %c0_48 = arith.constant 0 : index
    %105 = vector.load %arg12[%c0_47, %c0_48] : memref<1x32xf32, #tpu.memory_space<vmem>>, vector<1x32xf32>
    %106 = vector.broadcast %105 : vector<1x32xf32> to vector<8x32xf32>
    %107 = arith.addf %104, %106 : vector<8x32xf32>
    %108 = arith.addf %72, %107 : vector<8x32xf32>
    %c0_49 = arith.constant 0 : index
    %c0_50 = arith.constant 0 : index
    %c0_51 = arith.constant 0 : index
    %109 = vector.load %arg14[%c0_49, %c0_50, %c0_51] : memref<1x8x32xf32, #tpu.memory_space<vmem>>, vector<1x8x32xf32>
    %110 = vector.shape_cast %109 : vector<1x8x32xf32> to vector<8x32xf32>
    %111 = vector.shape_cast %108 : vector<8x32xf32> to vector<1x8x32xf32>
    tpu.vector_store %arg14[%c0_49, %c0_50, %c0_51], %111 {strides = array<i32>} : memref<1x8x32xf32, #tpu.memory_space<vmem>>, vector<1x8x32xf32>,
    return
  }
  func.func @transform_0(%arg0: i32) -> (i32, i32, i32) {
    %c0_i32 = arith.constant 0 : i32
    %c0_i32_0 = arith.constant 0 : i32
    %c0_i32_1 = arith.constant 0 : i32
    return %arg0, %c0_i32, %c0_i32_0 : i32, i32, i32
  }
  func.func @transform_1(%arg0: i32) -> (i32, i32, i32) {
    %c0_i32 = arith.constant 0 : i32
    %c0_i32_0 = arith.constant 0 : i32
    %c0_i32_1 = arith.constant 0 : i32
    return %arg0, %c0_i32, %c0_i32_0 : i32, i32, i32
  }
  func.func @transform_2(%arg0: i32) -> (i32, i32) {
    %c0_i32 = arith.constant 0 : i32
    %c0_i32_0 = arith.constant 0 : i32
    %c0_i32_1 = arith.constant 0 : i32
    return %c0_i32, %c0_i32_0 : i32, i32
  }
  func.func @transform_3(%arg0: i32) -> (i32, i32) {
    %c0_i32 = arith.constant 0 : i32
    %c0_i32_0 = arith.constant 0 : i32
    %c0_i32_1 = arith.constant 0 : i32
    return %c0_i32, %c0_i32_0 : i32, i32
  }
  func.func @transform_4(%arg0: i32) -> (i32, i32) {
    %c0_i32 = arith.constant 0 : i32
    %c0_i32_0 = arith.constant 0 : i32
    %c0_i32_1 = arith.constant 0 : i32
    return %c0_i32, %c0_i32_0 : i32, i32
  }
  func.func @transform_5(%arg0: i32) -> (i32, i32) {
    %c0_i32 = arith.constant 0 : i32
    %c0_i32_0 = arith.constant 0 : i32
    %c0_i32_1 = arith.constant 0 : i32
    return %c0_i32, %c0_i32_0 : i32, i32
  }
  func.func @transform_6(%arg0: i32) -> (i32, i32) {
    %c0_i32 = arith.constant 0 : i32
    %c0_i32_0 = arith.constant 0 : i32
    %c0_i32_1 = arith.constant 0 : i32
    return %c0_i32, %c0_i32_0 : i32, i32
  }
  func.func @transform_7(%arg0: i32) -> (i32, i32) {
    %c0_i32 = arith.constant 0 : i32
    %c0_i32_0 = arith.constant 0 : i32
    %c0_i32_1 = arith.constant 0 : i32
    return %c0_i32, %c0_i32_0 : i32, i32
  }
  func.func @transform_8(%arg0: i32) -> (i32, i32) {
    %c0_i32 = arith.constant 0 : i32
    %c0_i32_0 = arith.constant 0 : i32
    %c0_i32_1 = arith.constant 0 : i32
    return %c0_i32, %c0_i32_0 : i32, i32
  }
  func.func @transform_9(%arg0: i32) -> (i32, i32) {
    %c0_i32 = arith.constant 0 : i32
    %c0_i32_0 = arith.constant 0 : i32
    %c0_i32_1 = arith.constant 0 : i32
    return %c0_i32, %c0_i32_0 : i32, i32
  }
  func.func @transform_10(%arg0: i32) -> (i32, i32) {
    %c0_i32 = arith.constant 0 : i32
    %c0_i32_0 = arith.constant 0 : i32
    %c0_i32_1 = arith.constant 0 : i32
    return %c0_i32, %c0_i32_0 : i32, i32
  }
  func.func @transform_11(%arg0: i32) -> (i32, i32) {
    %c0_i32 = arith.constant 0 : i32
    %c0_i32_0 = arith.constant 0 : i32
    %c0_i32_1 = arith.constant 0 : i32
    return %c0_i32, %c0_i32_0 : i32, i32
  }
  func.func @transform_12(%arg0: i32) -> i32 {
    %c0_i32 = arith.constant 0 : i32
    %c0_i32_0 = arith.constant 0 : i32
    return %c0_i32 : i32
  }
  func.func @transform_13(%arg0: i32) -> (i32, i32, i32) {
    %c0_i32 = arith.constant 0 : i32
    %c0_i32_0 = arith.constant 0 : i32
    %c0_i32_1 = arith.constant 0 : i32
    return %arg0, %c0_i32, %c0_i32_0 : i32, i32, i32
  }
}

</mosaic_0001>

<llo_original>
// kernel: tpu_custom_call.1
$region0: #{tpu_custom_call.1}
  #allocation0 [shape = 'u32[]', space=smem, size = 0x4, offset = 0x4, fixed_abs, tag = 'smem constant byte address 0x4 - core index']
  #allocation1 [shape = 'u32[144,128]{1,0:T(1,128)}', space=vmem, size = 0x12000, scoped, tag = 'internal scratch']
  %s0 = inlined_call_operand.hbm [shape: f32[2,8,32], index: 0, kind: input, shape index: {}]
  %s1 = inlined_call_operand.hbm [shape: f32[2,8,8], index: 1, kind: input, shape index: {}]
  %s2 = inlined_call_operand.hbm [shape: f32[32,32], index: 2, kind: input, shape index: {}]
  %s3 = inlined_call_operand.hbm [shape: f32[1,32], index: 3, kind: input, shape index: {}]
  %s4 = inlined_call_operand.hbm [shape: f32[32,32], index: 4, kind: input, shape index: {}]
  %s5 = inlined_call_operand.hbm [shape: f32[1,32], index: 5, kind: input, shape index: {}]
  %s6 = inlined_call_operand.hbm [shape: f32[32,32], index: 6, kind: input, shape index: {}]
  %s7 = inlined_call_operand.hbm [shape: f32[1,32], index: 7, kind: input, shape index: {}]
  %s8 = inlined_call_operand.hbm [shape: f32[32,64], index: 8, kind: input, shape index: {}]
  %s9 = inlined_call_operand.hbm [shape: f32[1,64], index: 9, kind: input, shape index: {}]
  %s10 = inlined_call_operand.hbm [shape: f32[64,32], index: 10, kind: input, shape index: {}]
  %s11 = inlined_call_operand.hbm [shape: f32[1,32], index: 11, kind: input, shape index: {}]
  %s12 = inlined_call_operand.hbm [shape: f32[2], index: 12, kind: input, shape index: {}]
  %s13 = inlined_call_operand.hbm [shape: f32[2,8,32], index: 13, kind: output, shape index: {}]
  %s14 = sld [smem:[#allocation0]]
  $region137: #{tpu_custom_call.1} parent=0
    _
  %s16 = ssub.s32 1, %s14
  %s17 = scalar_select 0, %s16, %s14
  $region1: #{tpu_custom_call.1} parent=0
    #allocation2 [shape = 'u8[8192]{0}', space=vmem, size = 0x2000, scoped, tag = 'input window, operand 0']
    #allocation3 [shape = 's32[2]{0}', space=sflag, size = 0x8, scoped, tag = 'scoped memory for tpu_custom_call.1']
    #allocation4 [shape = 's32[2]{0}', space=sflag, size = 0x8, scoped, tag = 'scoped memory for tpu_custom_call.1']
    #allocation5 [shape = 's32[2]{0}', space=sflag, size = 0x8, scoped, tag = 'scoped memory for tpu_custom_call.1']
    #allocation6 [shape = 'u8[8192]{0}', space=vmem, size = 0x2000, scoped, tag = 'input window, operand 1']
    #allocation7 [shape = 's32[2]{0}', space=sflag, size = 0x8, scoped, tag = 'scoped memory for tpu_custom_call.1']
    #allocation8 [shape = 'u8[16384]{0}', space=vmem, size = 0x4000, scoped, tag = 'input window, operand 2, single buffered']
    #allocation9 [shape = 'u8[512]{0}', space=vmem, size = 0x400, scoped, tag = 'input window, operand 3, single buffered']
    #allocation10 [shape = 's32[1]{0}', space=sflag, size = 0x4, scoped, tag = 'scoped memory for tpu_custom_call.1']
    #allocation11 [shape = 'u8[16384]{0}', space=vmem, size = 0x4000, scoped, tag = 'input window, operand 4, single buffered']
    #allocation12 [shape = 'u8[512]{0}', space=vmem, size = 0x400, scoped, tag = 'input window, operand 5, single buffered']
    #allocation13 [shape = 's32[1]{0}', space=sflag, size = 0x4, scoped, tag = 'scoped memory for tpu_custom_call.1']
    #allocation14 [shape = 'u8[16384]{0}', space=vmem, size = 0x4000, scoped, tag = 'input window, operand 6, single buffered']
    #allocation15 [shape = 'u8[512]{0}', space=vmem, size = 0x400, scoped, tag = 'input window, operand 7, single buffered']
    #allocation16 [shape = 's32[1]{0}', space=sflag, size = 0x4, scoped, tag = 'scoped memory for tpu_custom_call.1']
    #allocation17 [shape = 'u8[16384]{0}', space=vmem, size = 0x4000, scoped, tag = 'input window, operand 8, single buffered']
    #allocation18 [shape = 'u8[512]{0}', space=vmem, size = 0x400, scoped, tag = 'input window, operand 9, single buffered']
    #allocation19 [shape = 's32[1]{0}', space=sflag, size = 0x4, scoped, tag = 'scoped memory for tpu_custom_call.1']
    #allocation20 [shape = 'u8[32768]{0}', space=vmem, size = 0x8000, scoped, tag = 'input window, operand 10, single buffered']
    #allocation21 [shape = 'u8[512]{0}', space=vmem, size = 0x400, scoped, tag = 'input window, operand 11, single buffered']
    #allocation22 [shape = 's32[1]{0}', space=sflag, size = 0x4, scoped, tag = 'scoped memory for tpu_custom_call.1']
    #allocation23 [shape = 'u8[512]{0}', space=smem, size = 0x200, scoped, tag = 'input window, operand 12, single buffered']
    #allocation24 [shape = 'u8[8192]{0}', space=vmem, size = 0x2000, scoped, tag = 'output window, operand 0']
    %18 = vsyncpa [#allocation3], 0
    %s19 = scalar_lea.sflag [#allocation3], 1
    %20 = vsyncpa %s19, 0
    %21 = vsyncpa [#allocation7], 0
    %s22 = scalar_lea.sflag [#allocation7], 1
    %23 = vsyncpa %s22, 0
    %24 = vsyncpa [#allocation10], 0
    %25 = vsyncpa [#allocation13], 0
    %26 = vsyncpa [#allocation16], 0
    %27 = vsyncpa [#allocation19], 0
    %28 = vsyncpa [#allocation22], 0
    %29 = vsyncpa [#allocation5], 0
    %30 = vsyncpa [#allocation4], 0
    %s31 = scalar_lea.sflag [#allocation4], 1
    %32 = vsyncpa %s31, 0
    loop: start=0, step=1, limit=4
    $region2: #{tpu_custom_call.1} parent=1 // loop_pre_header
      _
    $region3: #{tpu_custom_call.1} parent=1 // loop_header
      %s34 = sphi 0, %s38
      %p35 = scmp.ge.s32.totalorder %s34, 4
      %s44 = sphi 0, %s46
      %s47 = sphi 0, %s44
      %s48 = sphi 0, %s47
      %s64 = sphi 0, %s48
      %s70 = sphi 0, %s72
      %s73 = sphi 0, %s70
      %s74 = sphi 0, %s73
      %s90 = sphi 0, %s74
      %s94 = sphi 0, %s94
      %s96 = sphi 0, %s94
      %s97 = sphi 0, %s96
      %s111 = sphi 0, %s97
      %s115 = sphi 0, %s115
      %s117 = sphi 0, %s115
      %s118 = sphi 0, %s117
      %s132 = sphi 0, %s118
      %s136 = sphi 0, %s136
      %s138 = sphi 0, %s136
      %s139 = sphi 0, %s138
      %s153 = sphi 0, %s139
      %s157 = sphi 0, %s157
      %s159 = sphi 0, %s157
      %s160 = sphi 0, %s159
      %s174 = sphi 0, %s160
      %s178 = sphi 0, %s178
      %s180 = sphi 0, %s178
      %s181 = sphi 0, %s180
      %s195 = sphi 0, %s181
      %s199 = sphi 0, %s199
      %s201 = sphi 0, %s199
      %s202 = sphi 0, %s201
      %s216 = sphi 0, %s202
      %s220 = sphi 0, %s220
      %s222 = sphi 0, %s220
      %s223 = sphi 0, %s222
      %s237 = sphi 0, %s223
      %s241 = sphi 0, %s241
      %s243 = sphi 0, %s241
      %s244 = sphi 0, %s243
      %s258 = sphi 0, %s244
      %s262 = sphi 0, %s262
      %s264 = sphi 0, %s262
      %s265 = sphi 0, %s264
      %s279 = sphi 0, %s265
      %s283 = sphi 0, %s283
      %s285 = sphi 0, %s283
      %s286 = sphi 0, %s285
      %s300 = sphi 0, %s286
      %s304 = sphi 0, %s304
      %s306 = sphi 0, %s304
      %s307 = sphi 0, %s306
      %s321 = sphi 0, %s307
      %s327 = sphi 0, %s329
      %s330 = sphi 0, %s327
      %s331 = sphi 0, %s330
      %s347 = sphi 0, %s331
    $region4: #{tpu_custom_call.1} parent=1 // loop_header_branch
      %37 = sbr.rel (%p35) target = $region8
    $region5: #{tpu_custom_call.1} parent=1 // loop_body
      %s39 = ssub.s32 %s34, 1
      %s40 = ssub.s32 %s34, 2
      %s41 = sadd.s32 %s34, 1
      %s42 = ssub.s32 %s34, %s41
      %p43 = scmp.eq.s32.totalorder %s42, 0
      %s45 = sadd.s32 %s44, 1
      %s46 = scalar_select %p43, %s44, %s45
      %p49 = pneg %p43
      %p50 = scmp.eq.s32.totalorder %s34, 1
      %p51 = por %p49, %p50
      %p52 = scmp.ne.s32.totalorder %s44, %s47
      %p53 = scmp.eq.s32.totalorder %s34, 0
      %p54 = por %p52, %p53
      %p55 = scmp.ne.s32.totalorder %s44, %s47
      %p56 = scmp.eq.s32.totalorder %s39, 1
      %p57 = por %p55, %p56
      %p58 = scmp.ne.s32.totalorder %s47, %s48
      %p59 = scmp.eq.s32.totalorder %s39, 0
      %p60 = por %p58, %p59
      %p61 = scmp.ne.s32.totalorder %s47, %s48
      %p62 = scmp.eq.s32.totalorder %s40, 1
      %p63 = por %p61, %p62
      %p65 = scmp.ne.s32.totalorder %s48, %s64
      %p66 = scmp.eq.s32.totalorder %s40, 0
      %p67 = por %p65, %p66
      %s68 = ssub.s32 %s34, %s41
      %p69 = scmp.eq.s32.totalorder %s68, 0
      %s71 = sadd.s32 %s70, 1
      %s72 = scalar_select %p69, %s70, %s71
      %p75 = pneg %p69
      %p76 = scmp.eq.s32.totalorder %s34, 1
      %p77 = por %p75, %p76
      %p78 = scmp.ne.s32.totalorder %s70, %s73
      %p79 = scmp.eq.s32.totalorder %s34, 0
      %p80 = por %p78, %p79
      %p81 = scmp.ne.s32.totalorder %s70, %s73
      %p82 = scmp.eq.s32.totalorder %s39, 1
      %p83 = por %p81, %p82
      %p84 = scmp.ne.s32.totalorder %s73, %s74
      %p85 = scmp.eq.s32.totalorder %s39, 0
      %p86 = por %p84, %p85
      %p87 = scmp.ne.s32.totalorder %s73, %s74
      %p88 = scmp.eq.s32.totalorder %s40, 1
      %p89 = por %p87, %p88
      %p91 = scmp.ne.s32.totalorder %s74, %s90
      %p92 = scmp.eq.s32.totalorder %s40, 0
      %p93 = por %p91, %p92
      %s95 = sadd.s32 %s94, 1
      %p98 = scmp.eq.s32.totalorder %s34, 1
      %p99 = scmp.ne.s32.totalorder %s94, %s96
      %p100 = scmp.eq.s32.totalorder %s34, 0
      %p101 = por %p99, %p100
      %p102 = scmp.ne.s32.totalorder %s94, %s96
      %p103 = scmp.eq.s32.totalorder %s39, 1
      %p104 = por %p102, %p103
      %p105 = scmp.ne.s32.totalorder %s96, %s97
      %p106 = scmp.eq.s32.totalorder %s39, 0
      %p107 = por %p105, %p106
      %p108 = scmp.ne.s32.totalorder %s96, %s97
      %p109 = scmp.eq.s32.totalorder %s40, 1
      %p110 = por %p108, %p109
      %p112 = scmp.ne.s32.totalorder %s97, %s111
      %p113 = scmp.eq.s32.totalorder %s40, 0
      %p114 = por %p112, %p113
      %s116 = sadd.s32 %s115, 1
      %p119 = scmp.eq.s32.totalorder %s34, 1
      %p120 = scmp.ne.s32.totalorder %s115, %s117
      %p121 = scmp.eq.s32.totalorder %s34, 0
      %p122 = por %p120, %p121
      %p123 = scmp.ne.s32.totalorder %s115, %s117
      %p124 = scmp.eq.s32.totalorder %s39, 1
      %p125 = por %p123, %p124
      %p126 = scmp.ne.s32.totalorder %s117, %s118
      %p127 = scmp.eq.s32.totalorder %s39, 0
      %p128 = por %p126, %p127
      %p129 = scmp.ne.s32.totalorder %s117, %s118
      %p130 = scmp.eq.s32.totalorder %s40, 1
      %p131 = por %p129, %p130
      %p133 = scmp.ne.s32.totalorder %s118, %s132
      %p134 = scmp.eq.s32.totalorder %s40, 0
      %p135 = por %p133, %p134
      %s137 = sadd.s32 %s136, 1
      %p140 = scmp.eq.s32.totalorder %s34, 1
      %p141 = scmp.ne.s32.totalorder %s136, %s138
      %p142 = scmp.eq.s32.totalorder %s34, 0
      %p143 = por %p141, %p142
      %p144 = scmp.ne.s32.totalorder %s136, %s138
      %p145 = scmp.eq.s32.totalorder %s39, 1
      %p146 = por %p144, %p145
      %p147 = scmp.ne.s32.totalorder %s138, %s139
      %p148 = scmp.eq.s32.totalorder %s39, 0
      %p149 = por %p147, %p148
      %p150 = scmp.ne.s32.totalorder %s138, %s139
      %p151 = scmp.eq.s32.totalorder %s40, 1
      %p152 = por %p150, %p151
      %p154 = scmp.ne.s32.totalorder %s139, %s153
      %p155 = scmp.eq.s32.totalorder %s40, 0
      %p156 = por %p154, %p155
      %s158 = sadd.s32 %s157, 1
      %p161 = scmp.eq.s32.totalorder %s34, 1
      %p162 = scmp.ne.s32.totalorder %s157, %s159
      %p163 = scmp.eq.s32.totalorder %s34, 0
      %p164 = por %p162, %p163
      %p165 = scmp.ne.s32.totalorder %s157, %s159
      %p166 = scmp.eq.s32.totalorder %s39, 1
      %p167 = por %p165, %p166
      %p168 = scmp.ne.s32.totalorder %s159, %s160
      %p169 = scmp.eq.s32.totalorder %s39, 0
      %p170 = por %p168, %p169
      %p171 = scmp.ne.s32.totalorder %s159, %s160
      %p172 = scmp.eq.s32.totalorder %s40, 1
      %p173 = por %p171, %p172
      %p175 = scmp.ne.s32.totalorder %s160, %s174
      %p176 = scmp.eq.s32.totalorder %s40, 0
      %p177 = por %p175, %p176
      %s179 = sadd.s32 %s178, 1
      %p182 = scmp.eq.s32.totalorder %s34, 1
      %p183 = scmp.ne.s32.totalorder %s178, %s180
      %p184 = scmp.eq.s32.totalorder %s34, 0
      %p185 = por %p183, %p184
      %p186 = scmp.ne.s32.totalorder %s178, %s180
      %p187 = scmp.eq.s32.totalorder %s39, 1
      %p188 = por %p186, %p187
      %p189 = scmp.ne.s32.totalorder %s180, %s181
      %p190 = scmp.eq.s32.totalorder %s39, 0
      %p191 = por %p189, %p190
      %p192 = scmp.ne.s32.totalorder %s180, %s181
      %p193 = scmp.eq.s32.totalorder %s40, 1
      %p194 = por %p192, %p193
      %p196 = scmp.ne.s32.totalorder %s181, %s195
      %p197 = scmp.eq.s32.totalorder %s40, 0
      %p198 = por %p196, %p197
      %s200 = sadd.s32 %s199, 1
      %p203 = scmp.eq.s32.totalorder %s34, 1
      %p204 = scmp.ne.s32.totalorder %s199, %s201
      %p205 = scmp.eq.s32.totalorder %s34, 0
      %p206 = por %p204, %p205
      %p207 = scmp.ne.s32.totalorder %s199, %s201
      %p208 = scmp.eq.s32.totalorder %s39, 1
      %p209 = por %p207, %p208
      %p210 = scmp.ne.s32.totalorder %s201, %s202
      %p211 = scmp.eq.s32.totalorder %s39, 0
      %p212 = por %p210, %p211
      %p213 = scmp.ne.s32.totalorder %s201, %s202
      %p214 = scmp.eq.s32.totalorder %s40, 1
      %p215 = por %p213, %p214
      %p217 = scmp.ne.s32.totalorder %s202, %s216
      %p218 = scmp.eq.s32.totalorder %s40, 0
      %p219 = por %p217, %p218
      %s221 = sadd.s32 %s220, 1
      %p224 = scmp.eq.s32.totalorder %s34, 1
      %p225 = scmp.ne.s32.totalorder %s220, %s222
      %p226 = scmp.eq.s32.totalorder %s34, 0
      %p227 = por %p225, %p226
      %p228 = scmp.ne.s32.totalorder %s220, %s222
      %p229 = scmp.eq.s32.totalorder %s39, 1
      %p230 = por %p228, %p229
      %p231 = scmp.ne.s32.totalorder %s222, %s223
      %p232 = scmp.eq.s32.totalorder %s39, 0
      %p233 = por %p231, %p232
      %p234 = scmp.ne.s32.totalorder %s222, %s223
      %p235 = scmp.eq.s32.totalorder %s40, 1
      %p236 = por %p234, %p235
      %p238 = scmp.ne.s32.totalorder %s223, %s237
      %p239 = scmp.eq.s32.totalorder %s40, 0
      %p240 = por %p238, %p239
      %s242 = sadd.s32 %s241, 1
      %p245 = scmp.eq.s32.totalorder %s34, 1
      %p246 = scmp.ne.s32.totalorder %s241, %s243
      %p247 = scmp.eq.s32.totalorder %s34, 0
      %p248 = por %p246, %p247
      %p249 = scmp.ne.s32.totalorder %s241, %s243
      %p250 = scmp.eq.s32.totalorder %s39, 1
      %p251 = por %p249, %p250
      %p252 = scmp.ne.s32.totalorder %s243, %s244
      %p253 = scmp.eq.s32.totalorder %s39, 0
      %p254 = por %p252, %p253
      %p255 = scmp.ne.s32.totalorder %s243, %s244
      %p256 = scmp.eq.s32.totalorder %s40, 1
      %p257 = por %p255, %p256
      %p259 = scmp.ne.s32.totalorder %s244, %s258
      %p260 = scmp.eq.s32.totalorder %s40, 0
      %p261 = por %p259, %p260
      %s263 = sadd.s32 %s262, 1
      %p266 = scmp.eq.s32.totalorder %s34, 1
      %p267 = scmp.ne.s32.totalorder %s262, %s264
      %p268 = scmp.eq.s32.totalorder %s34, 0
      %p269 = por %p267, %p268
      %p270 = scmp.ne.s32.totalorder %s262, %s264
      %p271 = scmp.eq.s32.totalorder %s39, 1
      %p272 = por %p270, %p271
      %p273 = scmp.ne.s32.totalorder %s264, %s265
      %p274 = scmp.eq.s32.totalorder %s39, 0
      %p275 = por %p273, %p274
      %p276 = scmp.ne.s32.totalorder %s264, %s265
      %p277 = scmp.eq.s32.totalorder %s40, 1
      %p278 = por %p276, %p277
      %p280 = scmp.ne.s32.totalorder %s265, %s279
      %p281 = scmp.eq.s32.totalorder %s40, 0
      %p282 = por %p280, %p281
      %s284 = sadd.s32 %s283, 1
      %p287 = scmp.eq.s32.totalorder %s34, 1
      %p288 = scmp.ne.s32.totalorder %s283, %s285
      %p289 = scmp.eq.s32.totalorder %s34, 0
      %p290 = por %p288, %p289
      %p291 = scmp.ne.s32.totalorder %s283, %s285
      %p292 = scmp.eq.s32.totalorder %s39, 1
      %p293 = por %p291, %p292
      %p294 = scmp.ne.s32.totalorder %s285, %s286
      %p295 = scmp.eq.s32.totalorder %s39, 0
      %p296 = por %p294, %p295
      %p297 = scmp.ne.s32.totalorder %s285, %s286
      %p298 = scmp.eq.s32.totalorder %s40, 1
      %p299 = por %p297, %p298
      %p301 = scmp.ne.s32.totalorder %s286, %s300
      %p302 = scmp.eq.s32.totalorder %s40, 0
      %p303 = por %p301, %p302
      %s305 = sadd.s32 %s304, 1
      %p308 = scmp.eq.s32.totalorder %s34, 1
      %p309 = scmp.ne.s32.totalorder %s304, %s306
      %p310 = scmp.eq.s32.totalorder %s34, 0
      %p311 = por %p309, %p310
      %p312 = scmp.ne.s32.totalorder %s304, %s306
      %p313 = scmp.eq.s32.totalorder %s39, 1
      %p314 = por %p312, %p313
      %p315 = scmp.ne.s32.totalorder %s306, %s307
      %p316 = scmp.eq.s32.totalorder %s39, 0
      %p317 = por %p315, %p316
      %p318 = scmp.ne.s32.totalorder %s306, %s307
      %p319 = scmp.eq.s32.totalorder %s40, 1
      %p320 = por %p318, %p319
      %p322 = scmp.ne.s32.totalorder %s307, %s321
      %p323 = scmp.eq.s32.totalorder %s40, 0
      %p324 = por %p322, %p323
      %s325 = ssub.s32 %s34, %s41
      %p326 = scmp.eq.s32.totalorder %s325, 0
      %s328 = sadd.s32 %s327, 1
      %s329 = scalar_select %p326, %s327, %s328
      %p332 = pneg %p326
      %p333 = scmp.eq.s32.totalorder %s34, 1
      %p334 = por %p332, %p333
      %p335 = scmp.ne.s32.totalorder %s327, %s330
      %p336 = scmp.eq.s32.totalorder %s34, 0
      %p337 = por %p335, %p336
      %p338 = scmp.ne.s32.totalorder %s327, %s330
      %p339 = scmp.eq.s32.totalorder %s39, 1
      %p340 = por %p338, %p339
      %p341 = scmp.ne.s32.totalorder %s330, %s331
      %p342 = scmp.eq.s32.totalorder %s39, 0
      %p343 = por %p341, %p342
      %p344 = scmp.ne.s32.totalorder %s330, %s331
      %p345 = scmp.eq.s32.totalorder %s40, 1
      %p346 = por %p344, %p345
      %p348 = scmp.ne.s32.totalorder %s331, %s347
      %p349 = scmp.eq.s32.totalorder %s40, 0
      %p350 = por %p348, %p349
      %p351 = scmp.le.s32.totalorder 1, %s34
      %p352 = scmp.lt.s32.totalorder %s34, 3
      %p353 = pnand %p351, %p352
      %p354 = pneg %p353
      // Predicated region
      $region9: #{tpu_custom_call.1} parent=5 // pred_check
        _
      $region10: #{tpu_custom_call.1} parent=5 // pred_check_branch
        %356 = sbr.rel (%p353) target = $region12
      $region11: #{tpu_custom_call.1} parent=5 // pred_region
        %s357 = ssub.s32 %s34, 1
        // Predicated region
        $region13: #{tpu_custom_call.1} parent=11 // pred_check
          %p358 = pneg %p107
        $region14: #{tpu_custom_call.1} parent=11 // pred_check_branch
          %360 = sbr.rel (%p358) target = $region16
        $region15: #{tpu_custom_call.1} parent=11 // pred_region
          %s362 = ssub.s32 512, 512
          %363 = vsyncadd [#allocation7], %s362
          %s364 = sshll.u32 [#allocation8], 4
          %s365 = int_to_ptr.vmem [resolvable:$true] %s364
          %370 = dma.hbm_to_vmem [thread:$0]  %s2, 512, %s365, [#allocation7], 128, 128, 8
        $region16: #{tpu_custom_call.1} parent=11 // pred_fallthru
          _
        // Predicated region
        $region17: #{tpu_custom_call.1} parent=11 // pred_check
          %p371 = pneg %p128
        $region18: #{tpu_custom_call.1} parent=11 // pred_check_branch
          %373 = sbr.rel (%p371) target = $region20
        $region19: #{tpu_custom_call.1} parent=11 // pred_region
          %s375 = ssub.s32 16, 16
          %376 = vsyncadd [#allocation10], %s375
          %s378 = sshll.u32 [#allocation9], 4
          %s379 = int_to_ptr.vmem [resolvable:$true] %s378
          %381 = dma.hbm_to_vmem [thread:$0]  %s3, 16, %s379, [#allocation10]
        $region20: #{tpu_custom_call.1} parent=11 // pred_fallthru
          _
        // Predicated region
        $region21: #{tpu_custom_call.1} parent=11 // pred_check
          %p382 = pneg %p149
        $region22: #{tpu_custom_call.1} parent=11 // pred_check_branch
          %384 = sbr.rel (%p382) target = $region24
        $region23: #{tpu_custom_call.1} parent=11 // pred_region
          %s386 = ssub.s32 512, 512
          %387 = vsyncadd [#allocation10], %s386
          %s388 = sshll.u32 [#allocation11], 4
          %s389 = int_to_ptr.vmem [resolvable:$true] %s388
          %394 = dma.hbm_to_vmem [thread:$0]  %s4, 512, %s389, [#allocation10], 128, 128, 8
        $region24: #{tpu_custom_call.1} parent=11 // pred_fallthru
          _
        // Predicated region
        $region25: #{tpu_custom_call.1} parent=11 // pred_check
          %p395 = pneg %p170
        $region26: #{tpu_custom_call.1} parent=11 // pred_check_branch
          %397 = sbr.rel (%p395) target = $region28
        $region27: #{tpu_custom_call.1} parent=11 // pred_region
          %s399 = ssub.s32 16, 16
          %400 = vsyncadd [#allocation13], %s399
          %s402 = sshll.u32 [#allocation12], 4
          %s403 = int_to_ptr.vmem [resolvable:$true] %s402
          %405 = dma.hbm_to_vmem [thread:$0]  %s5, 16, %s403, [#allocation13]
        $region28: #{tpu_custom_call.1} parent=11 // pred_fallthru
          _
        // Predicated region
        $region29: #{tpu_custom_call.1} parent=11 // pred_check
          %p406 = pneg %p191
        $region30: #{tpu_custom_call.1} parent=11 // pred_check_branch
          %408 = sbr.rel (%p406) target = $region32
        $region31: #{tpu_custom_call.1} parent=11 // pred_region
          %s410 = ssub.s32 512, 512
          %411 = vsyncadd [#allocation13], %s410
          %s412 = sshll.u32 [#allocation14], 4
          %s413 = int_to_ptr.vmem [resolvable:$true] %s412
          %418 = dma.hbm_to_vmem [thread:$0]  %s6, 512, %s413, [#allocation13], 128, 128, 8
        $region32: #{tpu_custom_call.1} parent=11 // pred_fallthru
          _
        // Predicated region
        $region33: #{tpu_custom_call.1} parent=11 // pred_check
          %p419 = pneg %p212
        $region34: #{tpu_custom_call.1} parent=11 // pred_check_branch
          %421 = sbr.rel (%p419) target = $region36
        $region35: #{tpu_custom_call.1} parent=11 // pred_region
          %s423 = ssub.s32 16, 16
          %424 = vsyncadd [#allocation16], %s423
          %s426 = sshll.u32 [#allocation15], 4
          %s427 = int_to_ptr.vmem [resolvable:$true] %s426
          %429 = dma.hbm_to_vmem [thread:$0]  %s7, 16, %s427, [#allocation16]
        $region36: #{tpu_custom_call.1} parent=11 // pred_fallthru
          _
        // Predicated region
        $region37: #{tpu_custom_call.1} parent=11 // pred_check
          %p430 = pneg %p233
        $region38: #{tpu_custom_call.1} parent=11 // pred_check_branch
          %432 = sbr.rel (%p430) target = $region40
        $region39: #{tpu_custom_call.1} parent=11 // pred_region
          %s434 = ssub.s32 512, 512
          %435 = vsyncadd [#allocation16], %s434
          %s436 = sshll.u32 [#allocation17], 4
          %s437 = int_to_ptr.vmem [resolvable:$true] %s436
          %442 = dma.hbm_to_vmem [thread:$0]  %s8, 512, %s437, [#allocation16], 128, 128, 8
        $region40: #{tpu_custom_call.1} parent=11 // pred_fallthru
          _
        // Predicated region
        $region41: #{tpu_custom_call.1} parent=11 // pred_check
          %p443 = pneg %p254
        $region42: #{tpu_custom_call.1} parent=11 // pred_check_branch
          %445 = sbr.rel (%p443) target = $region44
        $region43: #{tpu_custom_call.1} parent=11 // pred_region
          %s447 = ssub.s32 16, 16
          %448 = vsyncadd [#allocation19], %s447
          %s450 = sshll.u32 [#allocation18], 4
          %s451 = int_to_ptr.vmem [resolvable:$true] %s450
          %453 = dma.hbm_to_vmem [thread:$0]  %s9, 16, %s451, [#allocation19]
        $region44: #{tpu_custom_call.1} parent=11 // pred_fallthru
          _
        // Predicated region
        $region45: #{tpu_custom_call.1} parent=11 // pred_check
          %p454 = pneg %p275
        $region46: #{tpu_custom_call.1} parent=11 // pred_check_branch
          %456 = sbr.rel (%p454) target = $region48
        $region47: #{tpu_custom_call.1} parent=11 // pred_region
          %s458 = ssub.s32 1024, 1024
          %459 = vsyncadd [#allocation19], %s458
          %s460 = sshll.u32 [#allocation20], 4
          %s461 = int_to_ptr.vmem [resolvable:$true] %s460
          %466 = dma.hbm_to_vmem [thread:$0]  %s10, 1024, %s461, [#allocation19], 128, 128, 8
        $region48: #{tpu_custom_call.1} parent=11 // pred_fallthru
          _
        // Predicated region
        $region49: #{tpu_custom_call.1} parent=11 // pred_check
          %p467 = pneg %p296
        $region50: #{tpu_custom_call.1} parent=11 // pred_check_branch
          %469 = sbr.rel (%p467) target = $region52
        $region51: #{tpu_custom_call.1} parent=11 // pred_region
          %s471 = ssub.s32 16, 16
          %472 = vsyncadd [#allocation22], %s471
          %s474 = sshll.u32 [#allocation21], 4
          %s475 = int_to_ptr.vmem [resolvable:$true] %s474
          %477 = dma.hbm_to_vmem [thread:$0]  %s11, 16, %s475, [#allocation22]
        $region52: #{tpu_custom_call.1} parent=11 // pred_fallthru
          _
        // Predicated region
        $region53: #{tpu_custom_call.1} parent=11 // pred_check
          %p478 = pneg %p317
        $region54: #{tpu_custom_call.1} parent=11 // pred_check_branch
          %480 = sbr.rel (%p478) target = $region56
        $region55: #{tpu_custom_call.1} parent=11 // pred_region
          %s482 = ssub.s32 16, 16
          %483 = vsyncadd [#allocation5], %s482
          %486 = dma.hbm_to_smem %s12, 16, [#allocation23], [#allocation5]
        $region56: #{tpu_custom_call.1} parent=11 // pred_fallthru
          _
      $region12: #{tpu_custom_call.1} parent=5 // pred_fallthru
        _
      %p487 = scmp.lt.s32.totalorder %s34, 2
      // Predicated region
      $region57: #{tpu_custom_call.1} parent=5 // pred_check
        %p488 = pneg %p487
      $region58: #{tpu_custom_call.1} parent=5 // pred_check_branch
        %490 = sbr.rel (%p488) target = $region60
      $region59: #{tpu_custom_call.1} parent=5 // pred_region
        // Predicated region
        $region61: #{tpu_custom_call.1} parent=59 // pred_check
          %p491 = pneg %p54
        $region62: #{tpu_custom_call.1} parent=59 // pred_check_branch
          %493 = sbr.rel (%p491) target = $region64
        $region63: #{tpu_custom_call.1} parent=59 // pred_region
          %s494 = sand.u32 %s44, 1
          %s495 = scalar_lea.sflag [#allocation3], %s494
          %s496 = sand.u32 %s44, 1
          %s497 = smul.addr %s496, 8
          %s498 = scalar_lea.vmem [#allocation2], %s497
          %s500 = ssub.s32 128, 128
          %501 = vsyncadd %s495, %s500
          %s502 = smul.addr %s34, 128
          %s503 = scalar_lea.hbm %s0, %s502
          %s505 = sshll.u32 %s498, 4
          %s506 = int_to_ptr.vmem [resolvable:$true] %s505
          %508 = dma.hbm_to_vmem [thread:$0]  %s503, 128, %s506, %s495
        $region64: #{tpu_custom_call.1} parent=59 // pred_fallthru
          _
        // Predicated region
        $region65: #{tpu_custom_call.1} parent=59 // pred_check
          %p509 = pneg %p80
        $region66: #{tpu_custom_call.1} parent=59 // pred_check_branch
          %511 = sbr.rel (%p509) target = $region68
        $region67: #{tpu_custom_call.1} parent=59 // pred_region
          %s512 = sand.u32 %s34, 1
          %s513 = scalar_lea.sflag [#allocation7], %s512
          %s514 = sand.u32 %s70, 1
          %s515 = smul.addr %s514, 8
          %s516 = scalar_lea.vmem [#allocation6], %s515
          %s518 = ssub.s32 128, 128
          %519 = vsyncadd %s513, %s518
          %s520 = smul.addr %s34, 128
          %s521 = scalar_lea.hbm %s1, %s520
          %s523 = sshll.u32 %s516, 4
          %s524 = int_to_ptr.vmem [resolvable:$true] %s523
          %526 = dma.hbm_to_vmem [thread:$0]  %s521, 128, %s524, %s513
        $region68: #{tpu_custom_call.1} parent=59 // pred_fallthru
          _
      $region60: #{tpu_custom_call.1} parent=5 // pred_fallthru
        _
      %p527 = scmp.le.s32.totalorder 1, %s34
      %p528 = scmp.lt.s32.totalorder %s34, 3
      %p529 = pnand %p527, %p528
      %p530 = pneg %p529
      // Predicated region
      $region69: #{tpu_custom_call.1} parent=5 // pred_check
        _
      $region70: #{tpu_custom_call.1} parent=5 // pred_check_branch
        %532 = sbr.rel (%p529) target = $region72
      $region71: #{tpu_custom_call.1} parent=5 // pred_region
        %s533 = ssub.s32 %s34, 1
        %s534 = sand.u32 %s47, 1
        %s535 = scalar_lea.sflag [#allocation3], %s534
        %s536 = sand.u32 %s47, 1
        %s537 = smul.addr %s536, 8
        %s538 = scalar_lea.vmem [#allocation2], %s537
        // Predicated region
        $region73: #{tpu_custom_call.1} parent=71 // pred_check
          %p539 = pneg %p60
        $region74: #{tpu_custom_call.1} parent=71 // pred_check_branch
          %541 = sbr.rel (%p539) target = $region76
        $region75: #{tpu_custom_call.1} parent=71 // pred_region
          %542 = dma.done %s535, 128
        $region76: #{tpu_custom_call.1} parent=71 // pred_fallthru
          _
        %s543 = sand.u32 %s39, 1
        %s544 = scalar_lea.sflag [#allocation7], %s543
        %s545 = sand.u32 %s73, 1
        %s546 = smul.addr %s545, 8
        %s547 = scalar_lea.vmem [#allocation6], %s546
        // Predicated region
        $region77: #{tpu_custom_call.1} parent=71 // pred_check
          %p548 = pneg %p86
        $region78: #{tpu_custom_call.1} parent=71 // pred_check_branch
          %550 = sbr.rel (%p548) target = $region80
        $region79: #{tpu_custom_call.1} parent=71 // pred_region
          %551 = dma.done %s544, 128
        $region80: #{tpu_custom_call.1} parent=71 // pred_fallthru
          _
        // Predicated region
        $region81: #{tpu_custom_call.1} parent=71 // pred_check
          %p552 = pneg %p107
        $region82: #{tpu_custom_call.1} parent=71 // pred_check_branch
          %554 = sbr.rel (%p552) target = $region84
        $region83: #{tpu_custom_call.1} parent=71 // pred_region
          %555 = dma.done [#allocation7], 512
        $region84: #{tpu_custom_call.1} parent=71 // pred_fallthru
          _
        // Predicated region
        $region85: #{tpu_custom_call.1} parent=71 // pred_check
          %p556 = pneg %p128
        $region86: #{tpu_custom_call.1} parent=71 // pred_check_branch
          %558 = sbr.rel (%p556) target = $region88
        $region87: #{tpu_custom_call.1} parent=71 // pred_region
          %559 = dma.done [#allocation10], 16
        $region88: #{tpu_custom_call.1} parent=71 // pred_fallthru
          _
        // Predicated region
        $region89: #{tpu_custom_call.1} parent=71 // pred_check
          %p560 = pneg %p149
        $region90: #{tpu_custom_call.1} parent=71 // pred_check_branch
          %562 = sbr.rel (%p560) target = $region92
        $region91: #{tpu_custom_call.1} parent=71 // pred_region
          %563 = dma.done [#allocation10], 512
        $region92: #{tpu_custom_call.1} parent=71 // pred_fallthru
          _
        // Predicated region
        $region93: #{tpu_custom_call.1} parent=71 // pred_check
          %p564 = pneg %p170
        $region94: #{tpu_custom_call.1} parent=71 // pred_check_branch
          %566 = sbr.rel (%p564) target = $region96
        $region95: #{tpu_custom_call.1} parent=71 // pred_region
          %567 = dma.done [#allocation13], 16
        $region96: #{tpu_custom_call.1} parent=71 // pred_fallthru
          _
        // Predicated region
        $region97: #{tpu_custom_call.1} parent=71 // pred_check
          %p568 = pneg %p191
        $region98: #{tpu_custom_call.1} parent=71 // pred_check_branch
          %570 = sbr.rel (%p568) target = $region100
        $region99: #{tpu_custom_call.1} parent=71 // pred_region
          %571 = dma.done [#allocation13], 512
        $region100: #{tpu_custom_call.1} parent=71 // pred_fallthru
          _
        // Predicated region
        $region101: #{tpu_custom_call.1} parent=71 // pred_check
          %p572 = pneg %p212
        $region102: #{tpu_custom_call.1} parent=71 // pred_check_branch
          %574 = sbr.rel (%p572) target = $region104
        $region103: #{tpu_custom_call.1} parent=71 // pred_region
          %575 = dma.done [#allocation16], 16
        $region104: #{tpu_custom_call.1} parent=71 // pred_fallthru
          _
        // Predicated region
        $region105: #{tpu_custom_call.1} parent=71 // pred_check
          %p576 = pneg %p233
        $region106: #{tpu_custom_call.1} parent=71 // pred_check_branch
          %578 = sbr.rel (%p576) target = $region108
        $region107: #{tpu_custom_call.1} parent=71 // pred_region
          %579 = dma.done [#allocation16], 512
        $region108: #{tpu_custom_call.1} parent=71 // pred_fallthru
          _
        // Predicated region
        $region109: #{tpu_custom_call.1} parent=71 // pred_check
          %p580 = pneg %p254
        $region110: #{tpu_custom_call.1} parent=71 // pred_check_branch
          %582 = sbr.rel (%p580) target = $region112
        $region111: #{tpu_custom_call.1} parent=71 // pred_region
          %583 = dma.done [#allocation19], 16
        $region112: #{tpu_custom_call.1} parent=71 // pred_fallthru
          _
        // Predicated region
        $region113: #{tpu_custom_call.1} parent=71 // pred_check
          %p584 = pneg %p275
        $region114: #{tpu_custom_call.1} parent=71 // pred_check_branch
          %586 = sbr.rel (%p584) target = $region116
        $region115: #{tpu_custom_call.1} parent=71 // pred_region
          %587 = dma.done [#allocation19], 1024
        $region116: #{tpu_custom_call.1} parent=71 // pred_fallthru
          _
        // Predicated region
        $region117: #{tpu_custom_call.1} parent=71 // pred_check
          %p588 = pneg %p296
        $region118: #{tpu_custom_call.1} parent=71 // pred_check_branch
          %590 = sbr.rel (%p588) target = $region120
        $region119: #{tpu_custom_call.1} parent=71 // pred_region
          %591 = dma.done [#allocation22], 16
        $region120: #{tpu_custom_call.1} parent=71 // pred_fallthru
          _
        // Predicated region
        $region121: #{tpu_custom_call.1} parent=71 // pred_check
          %p592 = pneg %p317
        $region122: #{tpu_custom_call.1} parent=71 // pred_check_branch
          %594 = sbr.rel (%p592) target = $region124
        $region123: #{tpu_custom_call.1} parent=71 // pred_region
          %595 = dma.done [#allocation5], 16
        $region124: #{tpu_custom_call.1} parent=71 // pred_fallthru
          _
        %596 = sfence
        %s597 = sand.u32 %s47, 1
        %s598 = scalar_lea.sflag [#allocation3], %s597
        %s599 = sand.u32 %s47, 1
        %s600 = smul.addr %s599, 8
        %s601 = scalar_lea.vmem [#allocation2], %s600
        %p602 = pneg %p60
        %p603 = pneg %p57
        %s604 = sand.u32 %s39, 1
        %s605 = scalar_lea.sflag [#allocation7], %s604
        %s606 = sand.u32 %s73, 1
        %s607 = smul.addr %s606, 8
        %s608 = scalar_lea.vmem [#allocation6], %s607
        %p609 = pneg %p86
        %p610 = pneg %p83
        %p611 = pneg %p107
        %p612 = pneg %p104
        %p613 = pneg %p128
        %p614 = pneg %p125
        %p615 = pneg %p149
        %p616 = pneg %p146
        %p617 = pneg %p170
        %p618 = pneg %p167
        %p619 = pneg %p191
        %p620 = pneg %p188
        %p621 = pneg %p212
        %p622 = pneg %p209
        %p623 = pneg %p233
        %p624 = pneg %p230
        %p625 = pneg %p254
        %p626 = pneg %p251
        %p627 = pneg %p275
        %p628 = pneg %p272
        %p629 = pneg %p296
        %p630 = pneg %p293
        %p631 = pneg %p317
        %p632 = pneg %p314
        %p633 = pneg %p343
        %p634 = pneg %p340
        %s635 = sand.u32 %s330, 1
        %s636 = scalar_lea.sflag [#allocation4], %s635
        %s637 = sand.u32 %s330, 1
        %s638 = smul.addr %s637, 8
        %s639 = scalar_lea.vmem [#allocation24], %s638
        %s640 = sld [smem:[#allocation23]]
        %s641 = sld [smem:[#allocation23 + $0x1]]
        %v642 = vld [vmem:[%s538] sm:$0xff]
        %vm643 = vcmask 261120
        %v644 = vsel %vm643, %v642, 0.0
        %645 = vadd.xlane.f32.xlu0 %v644
        %v646 = vpop.xlane.xlu0 %645
        %v647 = vrcp.pop 32.0
        %v648 = vmul.f32 %v646, %v647
        %v649 = vsub.f32 %v642, %v648
        %v650 = vmul.f32 %v649, %v649
        %v651 = vsel %vm643, %v650, 0.0
        %652 = vadd.xlane.f32.xlu0 %v651
        %v653 = vpop.xlane.xlu0 %652
        %v654 = vrcp.pop 31.0
        %v655 = vmul.f32 %v653, %v654
        %v656 = vrsqrt.pop %v655
        %v657 = vmul.f32 %v655, %v656
        %vm658 = vcmp.eq.f32.partialorder %v655, inf
        %v659 = vsel %vm658, %v655, %v657
        %vm660 = vcmp.eq.f32.partialorder %v655, 0.0
        %v661 = vand.u32 %v655, 2147483648
        %v662 = vsel %vm660, %v661, %v659
        %v663 = vadd.f32 %v662, 1e-06
        %v664 = vrcp.pop %v663
        %v665 = vstv %s640
        %v666 = vmul.f32 %v665, %v664
        %v667 = vmul.f32 %v666, %v649
        %v668 = vstv %s641
        %v669 = vadd.f32 %v667, %v668
        %v670 = vld [vmem:[#allocation8] sm:$0xff]
        %v671 = vld [vmem:[#allocation8 + $0x8] sm:$0xff]
        %v672 = vld [vmem:[#allocation8 + $0x10] sm:$0xff]
        %v673 = vld [vmem:[#allocation8 + $0x18] sm:$0xff]
        %v674 = vld [vmem:[#allocation9] sm:$0x1]
        %v676 = vlaneseq
        %v677 = vshrl.u32 %v676, 7
        %v678 = vsub.s32 0, %v677
        %v679 = vrot.slane %v674, %v678
        %v682 = vsel %vm643, %v669, 0
        %684 = vmatprep.subr.mxu0 0.0
        %685 = vmatpush1.msra.mxu0 %v670
        %686 = vmatprep.subr.mxu0 0.0
        %687 = vmatpush1.msra.mxu0 %v671
        %688 = vmatprep.subr.mxu0 0.0
        %689 = vmatpush1.msra.mxu0 %v672
        %690 = vmatprep.subr.mxu0 0.0
        %691 = vmatpush1.msra.mxu0 %v673
        %692 = vmatprep.subr.mxu0 0.0
        %693 = vmatpush1.msra.mxu0 0.0
        %694 = vmatprep.subr.mxu0 0.0
        %695 = vmatpush1.msra.mxu0 0.0
        %696 = vmatprep.subr.mxu0 0.0
        %697 = vmatpush1.msra.mxu0 0.0
        %698 = vmatprep.subr.mxu0 0.0
        %699 = vmatpush1.msra.mxu0 0.0
        %700 = vmatprep.subr.mxu0 0.0
        %701 = vmatpush1.msra.mxu0 0.0
        %702 = vmatprep.subr.mxu0 0.0
        %703 = vmatpush1.msra.mxu0 0.0
        %704 = vmatprep.subr.mxu0 0.0
        %705 = vmatpush1.msra.mxu0 0.0
        %706 = vmatprep.subr.mxu0 0.0
        %707 = vmatpush1.msra.mxu0 0.0
        %708 = vmatprep.subr.mxu0 0.0
        %709 = vmatpush1.msra.mxu0 0.0
        %710 = vmatprep.subr.mxu0 0.0
        %711 = vmatpush1.msra.mxu0 0.0
        %712 = vmatprep.subr.mxu0 0.0
        %713 = vmatpush1.msra.mxu0 0.0
        %714 = vmatprep.subr.mxu0 0.0
        %715 = vmatpush1.msra.mxu0 0.0
        %716 = vmatprep.subr.mxu0 0.0
        %717 = vmatpush1.msra.mxu0 0.0
        %718 = vmatprep.subr.mxu0 0.0
        %719 = vmatpush1.msra.mxu0 0.0
        %720 = vmatprep.subr.mxu0 0.0
        %721 = vmatpush1.msra.mxu0 0.0
        %722 = vmatprep.subr.mxu0 0.0
        %723 = vmatpush1.msra.mxu0 0.0
        %724 = vmatprep.subr.mxu0 0.0
        %725 = vmatpush1.msra.mxu0 0.0
        %726 = vmatprep.subr.mxu0 0.0
        %727 = vmatpush1.msra.mxu0 0.0
        %728 = vmatprep.subr.mxu0 0.0
        %729 = vmatpush1.msra.mxu0 0.0
        %730 = vmatprep.subr.mxu0 0.0
        %731 = vmatpush1.msra.mxu0 0.0
        %732 = vmatprep.subr.mxu0 0.0
        %733 = vmatpush1.msra.mxu0 0.0
        %734 = vmatprep.subr.mxu0 0.0
        %735 = vmatpush1.msra.mxu0 0.0
        %736 = vmatprep.subr.mxu0 0.0
        %737 = vmatpush1.msra.mxu0 0.0
        %738 = vmatprep.subr.mxu0 0.0
        %739 = vmatpush1.msra.mxu0 0.0
        %740 = vmatprep.subr.mxu0 0.0
        %741 = vmatpush1.msra.mxu0 0.0
        %742 = vmatprep.subr.mxu0 0.0
        %743 = vmatpush1.msra.mxu0 0.0
        %744 = vmatprep.subr.mxu0 0.0
        %745 = vmatpush1.msra.mxu0 0.0
        %746 = vmatprep.subr.mxu0 0.0
        %747 = vmatpush1.msra.mxu0 0.0
        %748 = vmatprep.mubr.f32.mxu0 0.0
        %749 = vmatmul.mubr.f32.gmra.mrb[0].mxu0 %v682
        %v750 = vpop.f32.mrb[0].mxu0
        %v751 = vadd.f32 %v679, %v750
        %v752 = vpop.f32.mrb[0].mxu0
        %753 = vdwg.mxu0
        %v754 = vld [vmem:[#allocation11] sm:$0xff]
        %v755 = vld [vmem:[#allocation11 + $0x8] sm:$0xff]
        %v756 = vld [vmem:[#allocation11 + $0x10] sm:$0xff]
        %v757 = vld [vmem:[#allocation11 + $0x18] sm:$0xff]
        %v758 = vld [vmem:[#allocation12] sm:$0x1]
        %v760 = vlaneseq
        %v761 = vshrl.u32 %v760, 7
        %v762 = vsub.s32 0, %v761
        %v763 = vrot.slane %v758, %v762
        %765 = vmatprep.subr.mxu0 0.0
        %766 = vmatpush1.msra.mxu0 %v754
        %767 = vmatprep.subr.mxu0 0.0
        %768 = vmatpush1.msra.mxu0 %v755
        %769 = vmatprep.subr.mxu0 0.0
        %770 = vmatpush1.msra.mxu0 %v756
        %771 = vmatprep.subr.mxu0 0.0
        %772 = vmatpush1.msra.mxu0 %v757
        %773 = vmatprep.subr.mxu0 0.0
        %774 = vmatpush1.msra.mxu0 0.0
        %775 = vmatprep.subr.mxu0 0.0
        %776 = vmatpush1.msra.mxu0 0.0
        %777 = vmatprep.subr.mxu0 0.0
        %778 = vmatpush1.msra.mxu0 0.0
        %779 = vmatprep.subr.mxu0 0.0
        %780 = vmatpush1.msra.mxu0 0.0
        %781 = vmatprep.subr.mxu0 0.0
        %782 = vmatpush1.msra.mxu0 0.0
        %783 = vmatprep.subr.mxu0 0.0
        %784 = vmatpush1.msra.mxu0 0.0
        %785 = vmatprep.subr.mxu0 0.0
        %786 = vmatpush1.msra.mxu0 0.0
        %787 = vmatprep.subr.mxu0 0.0
        %788 = vmatpush1.msra.mxu0 0.0
        %789 = vmatprep.subr.mxu0 0.0
        %790 = vmatpush1.msra.mxu0 0.0
        %791 = vmatprep.subr.mxu0 0.0
        %792 = vmatpush1.msra.mxu0 0.0
        %793 = vmatprep.subr.mxu0 0.0
        %794 = vmatpush1.msra.mxu0 0.0
        %795 = vmatprep.subr.mxu0 0.0
        %796 = vmatpush1.msra.mxu0 0.0
        %797 = vmatprep.subr.mxu0 0.0
        %798 = vmatpush1.msra.mxu0 0.0
        %799 = vmatprep.subr.mxu0 0.0
        %800 = vmatpush1.msra.mxu0 0.0
        %801 = vmatprep.subr.mxu0 0.0
        %802 = vmatpush1.msra.mxu0 0.0
        %803 = vmatprep.subr.mxu0 0.0
        %804 = vmatpush1.msra.mxu0 0.0
        %805 = vmatprep.subr.mxu0 0.0
        %806 = vmatpush1.msra.mxu0 0.0
        %807 = vmatprep.subr.mxu0 0.0
        %808 = vmatpush1.msra.mxu0 0.0
        %809 = vmatprep.subr.mxu0 0.0
        %810 = vmatpush1.msra.mxu0 0.0
        %811 = vmatprep.subr.mxu0 0.0
        %812 = vmatpush1.msra.mxu0 0.0
        %813 = vmatprep.subr.mxu0 0.0
        %814 = vmatpush1.msra.mxu0 0.0
        %815 = vmatprep.subr.mxu0 0.0
        %816 = vmatpush1.msra.mxu0 0.0
        %817 = vmatprep.subr.mxu0 0.0
        %818 = vmatpush1.msra.mxu0 0.0
        %819 = vmatprep.subr.mxu0 0.0
        %820 = vmatpush1.msra.mxu0 0.0
        %821 = vmatprep.subr.mxu0 0.0
        %822 = vmatpush1.msra.mxu0 0.0
        %823 = vmatprep.subr.mxu0 0.0
        %824 = vmatpush1.msra.mxu0 0.0
        %825 = vmatprep.subr.mxu0 0.0
        %826 = vmatpush1.msra.mxu0 0.0
        %827 = vmatprep.subr.mxu0 0.0
        %828 = vmatpush1.msra.mxu0 0.0
        %829 = vmatprep.mubr.f32.mxu0 0.0
        %830 = vmatmul.mubr.f32.gmra.mrb[0].mxu0 %v682
        %v831 = vpop.f32.mrb[0].mxu0
        %v832 = vadd.f32 %v763, %v831
        %v833 = vpop.f32.mrb[0].mxu0
        %834 = vdwg.mxu0
        %836 = vrot.lane.b32.xlu0 %v751, 120
        %v837 = vpop.permute.xlu0 %836
        %839 = vrot.lane.b32.xlu0 %v751, 112
        %v840 = vpop.permute.xlu0 %839
        %842 = vrot.lane.b32.xlu0 %v751, 104
        %v843 = vpop.permute.xlu0 %842
        %v845 = vcombine.low %v751, %v840
        %v846 = vcombine.high %v751, %v840
        %v848 = vunpack.c.l.s4 1983009808
        %v849 = vunpack.c.0.s8 %v848
        %v850 = vlaneseq
        %v851 = vshrl.u32 %v850, 7
        %v852 = vsub.s32 %v849, %v851
        %v853 = vrot.slane %v845, %v852
        %v855 = vunpack.c.l.s4 1983009808
        %v856 = vunpack.c.0.s8 %v855
        %v857 = vlaneseq
        %v858 = vshrl.u32 %v857, 7
        %v859 = vsub.s32 %v856, %v858
        %v860 = vrot.slane %v846, %v859
        %v861 = vcombine.low %v837, %v843
        %v862 = vcombine.high %v837, %v843
        %v864 = vunpack.c.l.s4 1983009808
        %v865 = vunpack.c.0.s8 %v864
        %v866 = vlaneseq
        %v867 = vshrl.u32 %v866, 7
        %v868 = vsub.s32 %v865, %v867
        %v869 = vrot.slane %v861, %v868
        %v871 = vunpack.c.l.s4 1983009808
        %v872 = vunpack.c.0.s8 %v871
        %v873 = vlaneseq
        %v874 = vshrl.u32 %v873, 7
        %v875 = vsub.s32 %v872, %v874
        %v876 = vrot.slane %v862, %v875
        %v877 = vcombine.low %v853, %v869
        %v878 = vcombine.high %v853, %v869
        %v880 = vunpack.c.l.s4 1934713408
        %v881 = vunpack.c.0.s8 %v880
        %v882 = vlaneseq
        %v883 = vshrl.u32 %v882, 7
        %v884 = vsub.s32 %v881, %v883
        %v885 = vrot.slane %v877, %v884
        %v887 = vunpack.c.l.s4 1934713408
        %v888 = vunpack.c.0.s8 %v887
        %v889 = vlaneseq
        %v890 = vshrl.u32 %v889, 7
        %v891 = vsub.s32 %v888, %v890
        %v892 = vrot.slane %v878, %v891
        %v893 = vcombine.low %v860, %v876
        %v894 = vcombine.high %v860, %v876
        %v896 = vunpack.c.l.s4 1934713408
        %v897 = vunpack.c.0.s8 %v896
        %v898 = vlaneseq
        %v899 = vshrl.u32 %v898, 7
        %v900 = vsub.s32 %v897, %v899
        %v901 = vrot.slane %v893, %v900
        %v903 = vunpack.c.l.s4 1934713408
        %v904 = vunpack.c.0.s8 %v903
        %v905 = vlaneseq
        %v906 = vshrl.u32 %v905, 7
        %v907 = vsub.s32 %v904, %v906
        %v908 = vrot.slane %v894, %v907
        %v909 = vcombine.high %v885, 0.0
        %v910 = vcombine.high %v892, 0.0
        %v911 = vcombine.high %v901, 0.0
        %v912 = vcombine.high %v908, 0.0
        %v913 = vcombine.low %v885, %v892
        %v915 = vunpack.c.l.s4 1983009808
        %v916 = vunpack.c.0.s8 %v915
        %v917 = vlaneseq
        %v918 = vshrl.u32 %v917, 7
        %v919 = vsub.s32 %v916, %v918
        %v920 = vrot.slane %v913, %v919
        %v921 = vcombine.low %v909, %v910
        %v923 = vunpack.c.l.s4 1983009808
        %v924 = vunpack.c.0.s8 %v923
        %v925 = vlaneseq
        %v926 = vshrl.u32 %v925, 7
        %v927 = vsub.s32 %v924, %v926
        %v928 = vrot.slane %v921, %v927
        %v929 = vcombine.low %v901, %v908
        %v931 = vunpack.c.l.s4 1983009808
        %v932 = vunpack.c.0.s8 %v931
        %v933 = vlaneseq
        %v934 = vshrl.u32 %v933, 7
        %v935 = vsub.s32 %v932, %v934
        %v936 = vrot.slane %v929, %v935
        %v937 = vcombine.low %v911, %v912
        %v939 = vunpack.c.l.s4 1983009808
        %v940 = vunpack.c.0.s8 %v939
        %v941 = vlaneseq
        %v942 = vshrl.u32 %v941, 7
        %v943 = vsub.s32 %v940, %v942
        %v944 = vrot.slane %v937, %v943
        %v945 = vcombine.low %v920, %v928
        %v946 = vcombine.high %v920, %v928
        %v948 = vunpack.c.l.s4 1934713408
        %v949 = vunpack.c.0.s8 %v948
        %v950 = vlaneseq
        %v951 = vshrl.u32 %v950, 7
        %v952 = vsub.s32 %v949, %v951
        %v953 = vrot.slane %v945, %v952
        %v955 = vunpack.c.l.s4 1934713408
        %v956 = vunpack.c.0.s8 %v955
        %v957 = vlaneseq
        %v958 = vshrl.u32 %v957, 7
        %v959 = vsub.s32 %v956, %v958
        %v960 = vrot.slane %v946, %v959
        %v961 = vcombine.low %v936, %v944
        %v962 = vcombine.high %v936, %v944
        %v964 = vunpack.c.l.s4 1934713408
        %v965 = vunpack.c.0.s8 %v964
        %v966 = vlaneseq
        %v967 = vshrl.u32 %v966, 7
        %v968 = vsub.s32 %v965, %v967
        %v969 = vrot.slane %v961, %v968
        %v971 = vunpack.c.l.s4 1934713408
        %v972 = vunpack.c.0.s8 %v971
        %v973 = vlaneseq
        %v974 = vshrl.u32 %v973, 7
        %v975 = vsub.s32 %v972, %v974
        %v976 = vrot.slane %v962, %v975
        %v977 = vcombine.low %v953, %v969
        %v978 = vcombine.high %v953, %v969
        %v979 = vcombine.low %v960, %v976
        %v980 = vcombine.high %v960, %v976
        %982 = vrot.lane.b32.xlu0 %v832, 120
        %v983 = vpop.permute.xlu0 %982
        %985 = vrot.lane.b32.xlu0 %v832, 112
        %v986 = vpop.permute.xlu0 %985
        %988 = vrot.lane.b32.xlu0 %v832, 104
        %v989 = vpop.permute.xlu0 %988
        %v991 = vcombine.low %v832, %v986
        %v992 = vcombine.high %v832, %v986
        %v994 = vunpack.c.l.s4 1983009808
        %v995 = vunpack.c.0.s8 %v994
        %v996 = vlaneseq
        %v997 = vshrl.u32 %v996, 7
        %v998 = vsub.s32 %v995, %v997
        %v999 = vrot.slane %v991, %v998
        %v1001 = vunpack.c.l.s4 1983009808
        %v1002 = vunpack.c.0.s8 %v1001
        %v1003 = vlaneseq
        %v1004 = vshrl.u32 %v1003, 7
        %v1005 = vsub.s32 %v1002, %v1004
        %v1006 = vrot.slane %v992, %v1005
        %v1007 = vcombine.low %v983, %v989
        %v1008 = vcombine.high %v983, %v989
        %v1010 = vunpack.c.l.s4 1983009808
        %v1011 = vunpack.c.0.s8 %v1010
        %v1012 = vlaneseq
        %v1013 = vshrl.u32 %v1012, 7
        %v1014 = vsub.s32 %v1011, %v1013
        %v1015 = vrot.slane %v1007, %v1014
        %v1017 = vunpack.c.l.s4 1983009808
        %v1018 = vunpack.c.0.s8 %v1017
        %v1019 = vlaneseq
        %v1020 = vshrl.u32 %v1019, 7
        %v1021 = vsub.s32 %v1018, %v1020
        %v1022 = vrot.slane %v1008, %v1021
        %v1023 = vcombine.low %v999, %v1015
        %v1024 = vcombine.high %v999, %v1015
        %v1026 = vunpack.c.l.s4 1934713408
        %v1027 = vunpack.c.0.s8 %v1026
        %v1028 = vlaneseq
        %v1029 = vshrl.u32 %v1028, 7
        %v1030 = vsub.s32 %v1027, %v1029
        %v1031 = vrot.slane %v1023, %v1030
        %v1033 = vunpack.c.l.s4 1934713408
        %v1034 = vunpack.c.0.s8 %v1033
        %v1035 = vlaneseq
        %v1036 = vshrl.u32 %v1035, 7
        %v1037 = vsub.s32 %v1034, %v1036
        %v1038 = vrot.slane %v1024, %v1037
        %v1039 = vcombine.low %v1006, %v1022
        %v1040 = vcombine.high %v1006, %v1022
        %v1042 = vunpack.c.l.s4 1934713408
        %v1043 = vunpack.c.0.s8 %v1042
        %v1044 = vlaneseq
        %v1045 = vshrl.u32 %v1044, 7
        %v1046 = vsub.s32 %v1043, %v1045
        %v1047 = vrot.slane %v1039, %v1046
        %v1049 = vunpack.c.l.s4 1934713408
        %v1050 = vunpack.c.0.s8 %v1049
        %v1051 = vlaneseq
        %v1052 = vshrl.u32 %v1051, 7
        %v1053 = vsub.s32 %v1050, %v1052
        %v1054 = vrot.slane %v1040, %v1053
        %v1055 = vcombine.high %v1031, 0.0
        %v1056 = vcombine.high %v1038, 0.0
        %v1057 = vcombine.high %v1047, 0.0
        %v1058 = vcombine.high %v1054, 0.0
        %v1059 = vcombine.low %v1031, %v1038
        %v1061 = vunpack.c.l.s4 1983009808
        %v1062 = vunpack.c.0.s8 %v1061
        %v1063 = vlaneseq
        %v1064 = vshrl.u32 %v1063, 7
        %v1065 = vsub.s32 %v1062, %v1064
        %v1066 = vrot.slane %v1059, %v1065
        %v1067 = vcombine.low %v1055, %v1056
        %v1069 = vunpack.c.l.s4 1983009808
        %v1070 = vunpack.c.0.s8 %v1069
        %v1071 = vlaneseq
        %v1072 = vshrl.u32 %v1071, 7
        %v1073 = vsub.s32 %v1070, %v1072
        %v1074 = vrot.slane %v1067, %v1073
        %v1075 = vcombine.low %v1047, %v1054
        %v1077 = vunpack.c.l.s4 1983009808
        %v1078 = vunpack.c.0.s8 %v1077
        %v1079 = vlaneseq
        %v1080 = vshrl.u32 %v1079, 7
        %v1081 = vsub.s32 %v1078, %v1080
        %v1082 = vrot.slane %v1075, %v1081
        %v1083 = vcombine.low %v1057, %v1058
        %v1085 = vunpack.c.l.s4 1983009808
        %v1086 = vunpack.c.0.s8 %v1085
        %v1087 = vlaneseq
        %v1088 = vshrl.u32 %v1087, 7
        %v1089 = vsub.s32 %v1086, %v1088
        %v1090 = vrot.slane %v1083, %v1089
        %v1091 = vcombine.low %v1066, %v1074
        %v1092 = vcombine.high %v1066, %v1074
        %v1094 = vunpack.c.l.s4 1934713408
        %v1095 = vunpack.c.0.s8 %v1094
        %v1096 = vlaneseq
        %v1097 = vshrl.u32 %v1096, 7
        %v1098 = vsub.s32 %v1095, %v1097
        %v1099 = vrot.slane %v1091, %v1098
        %v1101 = vunpack.c.l.s4 1934713408
        %v1102 = vunpack.c.0.s8 %v1101
        %v1103 = vlaneseq
        %v1104 = vshrl.u32 %v1103, 7
        %v1105 = vsub.s32 %v1102, %v1104
        %v1106 = vrot.slane %v1092, %v1105
        %v1107 = vcombine.low %v1082, %v1090
        %v1108 = vcombine.high %v1082, %v1090
        %v1110 = vunpack.c.l.s4 1934713408
        %v1111 = vunpack.c.0.s8 %v1110
        %v1112 = vlaneseq
        %v1113 = vshrl.u32 %v1112, 7
        %v1114 = vsub.s32 %v1111, %v1113
        %v1115 = vrot.slane %v1107, %v1114
        %v1117 = vunpack.c.l.s4 1934713408
        %v1118 = vunpack.c.0.s8 %v1117
        %v1119 = vlaneseq
        %v1120 = vshrl.u32 %v1119, 7
        %v1121 = vsub.s32 %v1118, %v1120
        %v1122 = vrot.slane %v1108, %v1121
        %v1123 = vcombine.low %v1099, %v1115
        %v1124 = vcombine.high %v1099, %v1115
        %v1125 = vcombine.low %v1106, %v1122
        %v1126 = vcombine.high %v1106, %v1122
        %v1127 = vmul.f32 %v977, 0.35355338
        %v1128 = vmul.f32 %v978, 0.35355338
        %v1129 = vmul.f32 %v979, 0.35355338
        %v1130 = vmul.f32 %v980, 0.35355338
        %v1131 = vld [vmem:[%s547] sm:$0xff]
        %vm1132 = vcmp.eq.f32.partialorder %v1131, 0.0
        %v1133 = vsel %vm1132, -1e+09, 0.0
        %vm1134 = vcmask 64512
        %v1136 = vsel %vm1134, %v1127, 0
        %v1139 = vsel %vm1134, %v977, 0
        %1141 = vmatprep.subr.mxu0 0.0
        %1142 = vmatpush1.xpose.msra.mxu0 %v1139
        %1143 = vmatprep.subr.mxu0 0.0
        %1144 = vmatpush1.xpose.msra.mxu0 0.0
        %1145 = vmatprep.subr.mxu0 0.0
        %1146 = vmatpush1.xpose.msra.mxu0 0.0
        %1147 = vmatprep.subr.mxu0 0.0
        %1148 = vmatpush1.xpose.msra.mxu0 0.0
        %1149 = vmatprep.subr.mxu0 0.0
        %1150 = vmatpush1.xpose.msra.mxu0 0.0
        %1151 = vmatprep.subr.mxu0 0.0
        %1152 = vmatpush1.xpose.msra.mxu0 0.0
        %1153 = vmatprep.subr.mxu0 0.0
        %1154 = vmatpush1.xpose.msra.mxu0 0.0
        %1155 = vmatprep.subr.mxu0 0.0
        %1156 = vmatpush1.xpose.msra.mxu0 0.0
        %1157 = vmatprep.subr.mxu0 0.0
        %1158 = vmatpush1.xpose.msra.mxu0 0.0
        %1159 = vmatprep.subr.mxu0 0.0
        %1160 = vmatpush1.xpose.msra.mxu0 0.0
        %1161 = vmatprep.subr.mxu0 0.0
        %1162 = vmatpush1.xpose.msra.mxu0 0.0
        %1163 = vmatprep.subr.mxu0 0.0
        %1164 = vmatpush1.xpose.msra.mxu0 0.0
        %1165 = vmatprep.subr.mxu0 0.0
        %1166 = vmatpush1.xpose.msra.mxu0 0.0
        %1167 = vmatprep.subr.mxu0 0.0
        %1168 = vmatpush1.xpose.msra.mxu0 0.0
        %1169 = vmatprep.subr.mxu0 0.0
        %1170 = vmatpush1.xpose.msra.mxu0 0.0
        %1171 = vmatprep.subr.mxu0 0.0
        %1172 = vmatpush1.xpose.msra.mxu0 0.0
        %1173 = vmatprep.subr.mxu0 0.0
        %1174 = vmatpush1.xpose.msra.mxu0 0.0
        %1175 = vmatprep.subr.mxu0 0.0
        %1176 = vmatpush1.xpose.msra.mxu0 0.0
        %1177 = vmatprep.subr.mxu0 0.0
        %1178 = vmatpush1.xpose.msra.mxu0 0.0
        %1179 = vmatprep.subr.mxu0 0.0
        %1180 = vmatpush1.xpose.msra.mxu0 0.0
        %1181 = vmatprep.subr.mxu0 0.0
        %1182 = vmatpush1.xpose.msra.mxu0 0.0
        %1183 = vmatprep.subr.mxu0 0.0
        %1184 = vmatpush1.xpose.msra.mxu0 0.0
        %1185 = vmatprep.subr.mxu0 0.0
        %1186 = vmatpush1.xpose.msra.mxu0 0.0
        %1187 = vmatprep.subr.mxu0 0.0
        %1188 = vmatpush1.xpose.msra.mxu0 0.0
        %1189 = vmatprep.subr.mxu0 0.0
        %1190 = vmatpush1.xpose.msra.mxu0 0.0
        %1191 = vmatprep.subr.mxu0 0.0
        %1192 = vmatpush1.xpose.msra.mxu0 0.0
        %1193 = vmatprep.subr.mxu0 0.0
        %1194 = vmatpush1.xpose.msra.mxu0 0.0
        %1195 = vmatprep.subr.mxu0 0.0
        %1196 = vmatpush1.xpose.msra.mxu0 0.0
        %1197 = vmatprep.subr.mxu0 0.0
        %1198 = vmatpush1.xpose.msra.mxu0 0.0
        %1199 = vmatprep.subr.mxu0 0.0
        %1200 = vmatpush1.xpose.msra.mxu0 0.0
        %1201 = vmatprep.subr.mxu0 0.0
        %1202 = vmatpush1.xpose.msra.mxu0 0.0
        %1203 = vmatprep.subr.mxu0 0.0
        %1204 = vmatpush1.xpose.msra.mxu0 0.0
        %1205 = vmatprep.mubr.f32.mxu0 0.0
        %1206 = vmatmul.mubr.f32.gmra.mrb[0].mxu0 %v1136
        %v1207 = vpop.f32.mrb[0].mxu0
        %v1208 = vadd.f32 %v1133, %v1207
        %v1209 = vpop.f32.mrb[0].mxu0
        %1210 = vdwg.mxu0
        %v1212 = vsel %vm1134, %v1128, 0
        %v1215 = vsel %vm1134, %v978, 0
        %1217 = vmatprep.subr.mxu0 0.0
        %1218 = vmatpush1.xpose.msra.mxu0 %v1215
        %1219 = vmatprep.subr.mxu0 0.0
        %1220 = vmatpush1.xpose.msra.mxu0 0.0
        %1221 = vmatprep.subr.mxu0 0.0
        %1222 = vmatpush1.xpose.msra.mxu0 0.0
        %1223 = vmatprep.subr.mxu0 0.0
        %1224 = vmatpush1.xpose.msra.mxu0 0.0
        %1225 = vmatprep.subr.mxu0 0.0
        %1226 = vmatpush1.xpose.msra.mxu0 0.0
        %1227 = vmatprep.subr.mxu0 0.0
        %1228 = vmatpush1.xpose.msra.mxu0 0.0
        %1229 = vmatprep.subr.mxu0 0.0
        %1230 = vmatpush1.xpose.msra.mxu0 0.0
        %1231 = vmatprep.subr.mxu0 0.0
        %1232 = vmatpush1.xpose.msra.mxu0 0.0
        %1233 = vmatprep.subr.mxu0 0.0
        %1234 = vmatpush1.xpose.msra.mxu0 0.0
        %1235 = vmatprep.subr.mxu0 0.0
        %1236 = vmatpush1.xpose.msra.mxu0 0.0
        %1237 = vmatprep.subr.mxu0 0.0
        %1238 = vmatpush1.xpose.msra.mxu0 0.0
        %1239 = vmatprep.subr.mxu0 0.0
        %1240 = vmatpush1.xpose.msra.mxu0 0.0
        %1241 = vmatprep.subr.mxu0 0.0
        %1242 = vmatpush1.xpose.msra.mxu0 0.0
        %1243 = vmatprep.subr.mxu0 0.0
        %1244 = vmatpush1.xpose.msra.mxu0 0.0
        %1245 = vmatprep.subr.mxu0 0.0
        %1246 = vmatpush1.xpose.msra.mxu0 0.0
        %1247 = vmatprep.subr.mxu0 0.0
        %1248 = vmatpush1.xpose.msra.mxu0 0.0
        %1249 = vmatprep.subr.mxu0 0.0
        %1250 = vmatpush1.xpose.msra.mxu0 0.0
        %1251 = vmatprep.subr.mxu0 0.0
        %1252 = vmatpush1.xpose.msra.mxu0 0.0
        %1253 = vmatprep.subr.mxu0 0.0
        %1254 = vmatpush1.xpose.msra.mxu0 0.0
        %1255 = vmatprep.subr.mxu0 0.0
        %1256 = vmatpush1.xpose.msra.mxu0 0.0
        %1257 = vmatprep.subr.mxu0 0.0
        %1258 = vmatpush1.xpose.msra.mxu0 0.0
        %1259 = vmatprep.subr.mxu0 0.0
        %1260 = vmatpush1.xpose.msra.mxu0 0.0
        %1261 = vmatprep.subr.mxu0 0.0
        %1262 = vmatpush1.xpose.msra.mxu0 0.0
        %1263 = vmatprep.subr.mxu0 0.0
        %1264 = vmatpush1.xpose.msra.mxu0 0.0
        %1265 = vmatprep.subr.mxu0 0.0
        %1266 = vmatpush1.xpose.msra.mxu0 0.0
        %1267 = vmatprep.subr.mxu0 0.0
        %1268 = vmatpush1.xpose.msra.mxu0 0.0
        %1269 = vmatprep.subr.mxu0 0.0
        %1270 = vmatpush1.xpose.msra.mxu0 0.0
        %1271 = vmatprep.subr.mxu0 0.0
        %1272 = vmatpush1.xpose.msra.mxu0 0.0
        %1273 = vmatprep.subr.mxu0 0.0
        %1274 = vmatpush1.xpose.msra.mxu0 0.0
        %1275 = vmatprep.subr.mxu0 0.0
        %1276 = vmatpush1.xpose.msra.mxu0 0.0
        %1277 = vmatprep.subr.mxu0 0.0
        %1278 = vmatpush1.xpose.msra.mxu0 0.0
        %1279 = vmatprep.subr.mxu0 0.0
        %1280 = vmatpush1.xpose.msra.mxu0 0.0
        %1281 = vmatprep.mubr.f32.mxu0 0.0
        %1282 = vmatmul.mubr.f32.gmra.mrb[0].mxu0 %v1212
        %v1283 = vpop.f32.mrb[0].mxu0
        %v1284 = vadd.f32 %v1133, %v1283
        %v1285 = vpop.f32.mrb[0].mxu0
        %1286 = vdwg.mxu0
        %v1288 = vsel %vm1134, %v1129, 0
        %v1291 = vsel %vm1134, %v979, 0
        %1293 = vmatprep.subr.mxu0 0.0
        %1294 = vmatpush1.xpose.msra.mxu0 %v1291
        %1295 = vmatprep.subr.mxu0 0.0
        %1296 = vmatpush1.xpose.msra.mxu0 0.0
        %1297 = vmatprep.subr.mxu0 0.0
        %1298 = vmatpush1.xpose.msra.mxu0 0.0
        %1299 = vmatprep.subr.mxu0 0.0
        %1300 = vmatpush1.xpose.msra.mxu0 0.0
        %1301 = vmatprep.subr.mxu0 0.0
        %1302 = vmatpush1.xpose.msra.mxu0 0.0
        %1303 = vmatprep.subr.mxu0 0.0
        %1304 = vmatpush1.xpose.msra.mxu0 0.0
        %1305 = vmatprep.subr.mxu0 0.0
        %1306 = vmatpush1.xpose.msra.mxu0 0.0
        %1307 = vmatprep.subr.mxu0 0.0
        %1308 = vmatpush1.xpose.msra.mxu0 0.0
        %1309 = vmatprep.subr.mxu0 0.0
        %1310 = vmatpush1.xpose.msra.mxu0 0.0
        %1311 = vmatprep.subr.mxu0 0.0
        %1312 = vmatpush1.xpose.msra.mxu0 0.0
        %1313 = vmatprep.subr.mxu0 0.0
        %1314 = vmatpush1.xpose.msra.mxu0 0.0
        %1315 = vmatprep.subr.mxu0 0.0
        %1316 = vmatpush1.xpose.msra.mxu0 0.0
        %1317 = vmatprep.subr.mxu0 0.0
        %1318 = vmatpush1.xpose.msra.mxu0 0.0
        %1319 = vmatprep.subr.mxu0 0.0
        %1320 = vmatpush1.xpose.msra.mxu0 0.0
        %1321 = vmatprep.subr.mxu0 0.0
        %1322 = vmatpush1.xpose.msra.mxu0 0.0
        %1323 = vmatprep.subr.mxu0 0.0
        %1324 = vmatpush1.xpose.msra.mxu0 0.0
        %1325 = vmatprep.subr.mxu0 0.0
        %1326 = vmatpush1.xpose.msra.mxu0 0.0
        %1327 = vmatprep.subr.mxu0 0.0
        %1328 = vmatpush1.xpose.msra.mxu0 0.0
        %1329 = vmatprep.subr.mxu0 0.0
        %1330 = vmatpush1.xpose.msra.mxu0 0.0
        %1331 = vmatprep.subr.mxu0 0.0
        %1332 = vmatpush1.xpose.msra.mxu0 0.0
        %1333 = vmatprep.subr.mxu0 0.0
        %1334 = vmatpush1.xpose.msra.mxu0 0.0
        %1335 = vmatprep.subr.mxu0 0.0
        %1336 = vmatpush1.xpose.msra.mxu0 0.0
        %1337 = vmatprep.subr.mxu0 0.0
        %1338 = vmatpush1.xpose.msra.mxu0 0.0
        %1339 = vmatprep.subr.mxu0 0.0
        %1340 = vmatpush1.xpose.msra.mxu0 0.0
        %1341 = vmatprep.subr.mxu0 0.0
        %1342 = vmatpush1.xpose.msra.mxu0 0.0
        %1343 = vmatprep.subr.mxu0 0.0
        %1344 = vmatpush1.xpose.msra.mxu0 0.0
        %1345 = vmatprep.subr.mxu0 0.0
        %1346 = vmatpush1.xpose.msra.mxu0 0.0
        %1347 = vmatprep.subr.mxu0 0.0
        %1348 = vmatpush1.xpose.msra.mxu0 0.0
        %1349 = vmatprep.subr.mxu0 0.0
        %1350 = vmatpush1.xpose.msra.mxu0 0.0
        %1351 = vmatprep.subr.mxu0 0.0
        %1352 = vmatpush1.xpose.msra.mxu0 0.0
        %1353 = vmatprep.subr.mxu0 0.0
        %1354 = vmatpush1.xpose.msra.mxu0 0.0
        %1355 = vmatprep.subr.mxu0 0.0
        %1356 = vmatpush1.xpose.msra.mxu0 0.0
        %1357 = vmatprep.mubr.f32.mxu0 0.0
        %1358 = vmatmul.mubr.f32.gmra.mrb[0].mxu0 %v1288
        %v1359 = vpop.f32.mrb[0].mxu0
        %v1360 = vadd.f32 %v1133, %v1359
        %v1361 = vpop.f32.mrb[0].mxu0
        %1362 = vdwg.mxu0
        %v1364 = vsel %vm1134, %v1130, 0
        %v1367 = vsel %vm1134, %v980, 0
        %1369 = vmatprep.subr.mxu0 0.0
        %1370 = vmatpush1.xpose.msra.mxu0 %v1367
        %1371 = vmatprep.subr.mxu0 0.0
        %1372 = vmatpush1.xpose.msra.mxu0 0.0
        %1373 = vmatprep.subr.mxu0 0.0
        %1374 = vmatpush1.xpose.msra.mxu0 0.0
        %1375 = vmatprep.subr.mxu0 0.0
        %1376 = vmatpush1.xpose.msra.mxu0 0.0
        %1377 = vmatprep.subr.mxu0 0.0
        %1378 = vmatpush1.xpose.msra.mxu0 0.0
        %1379 = vmatprep.subr.mxu0 0.0
        %1380 = vmatpush1.xpose.msra.mxu0 0.0
        %1381 = vmatprep.subr.mxu0 0.0
        %1382 = vmatpush1.xpose.msra.mxu0 0.0
        %1383 = vmatprep.subr.mxu0 0.0
        %1384 = vmatpush1.xpose.msra.mxu0 0.0
        %1385 = vmatprep.subr.mxu0 0.0
        %1386 = vmatpush1.xpose.msra.mxu0 0.0
        %1387 = vmatprep.subr.mxu0 0.0
        %1388 = vmatpush1.xpose.msra.mxu0 0.0
        %1389 = vmatprep.subr.mxu0 0.0
        %1390 = vmatpush1.xpose.msra.mxu0 0.0
        %1391 = vmatprep.subr.mxu0 0.0
        %1392 = vmatpush1.xpose.msra.mxu0 0.0
        %1393 = vmatprep.subr.mxu0 0.0
        %1394 = vmatpush1.xpose.msra.mxu0 0.0
        %1395 = vmatprep.subr.mxu0 0.0
        %1396 = vmatpush1.xpose.msra.mxu0 0.0
        %1397 = vmatprep.subr.mxu0 0.0
        %1398 = vmatpush1.xpose.msra.mxu0 0.0
        %1399 = vmatprep.subr.mxu0 0.0
        %1400 = vmatpush1.xpose.msra.mxu0 0.0
        %1401 = vmatprep.subr.mxu0 0.0
        %1402 = vmatpush1.xpose.msra.mxu0 0.0
        %1403 = vmatprep.subr.mxu0 0.0
        %1404 = vmatpush1.xpose.msra.mxu0 0.0
        %1405 = vmatprep.subr.mxu0 0.0
        %1406 = vmatpush1.xpose.msra.mxu0 0.0
        %1407 = vmatprep.subr.mxu0 0.0
        %1408 = vmatpush1.xpose.msra.mxu0 0.0
        %1409 = vmatprep.subr.mxu0 0.0
        %1410 = vmatpush1.xpose.msra.mxu0 0.0
        %1411 = vmatprep.subr.mxu0 0.0
        %1412 = vmatpush1.xpose.msra.mxu0 0.0
        %1413 = vmatprep.subr.mxu0 0.0
        %1414 = vmatpush1.xpose.msra.mxu0 0.0
        %1415 = vmatprep.subr.mxu0 0.0
        %1416 = vmatpush1.xpose.msra.mxu0 0.0
        %1417 = vmatprep.subr.mxu0 0.0
        %1418 = vmatpush1.xpose.msra.mxu0 0.0
        %1419 = vmatprep.subr.mxu0 0.0
        %1420 = vmatpush1.xpose.msra.mxu0 0.0
        %1421 = vmatprep.subr.mxu0 0.0
        %1422 = vmatpush1.xpose.msra.mxu0 0.0
        %1423 = vmatprep.subr.mxu0 0.0
        %1424 = vmatpush1.xpose.msra.mxu0 0.0
        %1425 = vmatprep.subr.mxu0 0.0
        %1426 = vmatpush1.xpose.msra.mxu0 0.0
        %1427 = vmatprep.subr.mxu0 0.0
        %1428 = vmatpush1.xpose.msra.mxu0 0.0
        %1429 = vmatprep.subr.mxu0 0.0
        %1430 = vmatpush1.xpose.msra.mxu0 0.0
        %1431 = vmatprep.subr.mxu0 0.0
        %1432 = vmatpush1.xpose.msra.mxu0 0.0
        %1433 = vmatprep.mubr.f32.mxu0 0.0
        %1434 = vmatmul.mubr.f32.gmra.mrb[0].mxu0 %v1364
        %v1435 = vpop.f32.mrb[0].mxu0
        %v1436 = vadd.f32 %v1133, %v1435
        %v1437 = vpop.f32.mrb[0].mxu0
        %1438 = vdwg.mxu0
        %v1439 = vsel %vm1134, %v1208, -inf
        %1440 = vmax.xlane.f32.xlu0 %v1439
        %v1441 = vpop.xlane.xlu0 %1440
        %v1442 = vsel %vm1134, %v1284, -inf
        %1443 = vmax.xlane.f32.xlu0 %v1442
        %v1444 = vpop.xlane.xlu0 %1443
        %v1445 = vsel %vm1134, %v1360, -inf
        %1446 = vmax.xlane.f32.xlu0 %v1445
        %v1447 = vpop.xlane.xlu0 %1446
        %v1448 = vsel %vm1134, %v1436, -inf
        %1449 = vmax.xlane.f32.xlu0 %v1448
        %v1450 = vpop.xlane.xlu0 %1449
        %v1451 = vsub.f32 %v1208, %v1441
        %v1452 = vsub.f32 %v1284, %v1444
        %v1453 = vsub.f32 %v1360, %v1447
        %v1454 = vsub.f32 %v1436, %v1450
        %v1455 = vmul.f32 %v1451, 1.442695
        %v1456 = vpow.pop %v1455
        %v1457 = vmul.f32 %v1452, 1.442695
        %v1458 = vpow.pop %v1457
        %v1459 = vmul.f32 %v1453, 1.442695
        %v1460 = vpow.pop %v1459
        %v1461 = vmul.f32 %v1454, 1.442695
        %v1462 = vpow.pop %v1461
        %v1463 = vsel %vm1134, %v1456, 0.0
        %1464 = vadd.xlane.f32.xlu0 %v1463
        %v1465 = vpop.xlane.xlu0 %1464
        %v1466 = vsel %vm1134, %v1458, 0.0
        %1467 = vadd.xlane.f32.xlu0 %v1466
        %v1468 = vpop.xlane.xlu0 %1467
        %v1469 = vsel %vm1134, %v1460, 0.0
        %1470 = vadd.xlane.f32.xlu0 %v1469
        %v1471 = vpop.xlane.xlu0 %1470
        %v1472 = vsel %vm1134, %v1462, 0.0
        %1473 = vadd.xlane.f32.xlu0 %v1472
        %v1474 = vpop.xlane.xlu0 %1473
        %v1475 = vrcp.pop %v1465
        %v1476 = vrcp.pop %v1468
        %v1477 = vrcp.pop %v1471
        %v1478 = vrcp.pop %v1474
        %v1479 = vmul.f32 %v1456, %v1475
        %v1480 = vmul.f32 %v1458, %v1476
        %v1481 = vmul.f32 %v1460, %v1477
        %v1482 = vmul.f32 %v1462, %v1478
        %v1484 = vsel %vm1134, %v1479, 0
        %1486 = vmatprep.subr.mxu0 0.0
        %1487 = vmatpush1.msra.mxu0 %v1123
        %1488 = vmatprep.subr.mxu0 0.0
        %1489 = vmatpush1.msra.mxu0 0.0
        %1490 = vmatprep.subr.mxu0 0.0
        %1491 = vmatpush1.msra.mxu0 0.0
        %1492 = vmatprep.subr.mxu0 0.0
        %1493 = vmatpush1.msra.mxu0 0.0
        %1494 = vmatprep.subr.mxu0 0.0
        %1495 = vmatpush1.msra.mxu0 0.0
        %1496 = vmatprep.subr.mxu0 0.0
        %1497 = vmatpush1.msra.mxu0 0.0
        %1498 = vmatprep.subr.mxu0 0.0
        %1499 = vmatpush1.msra.mxu0 0.0
        %1500 = vmatprep.subr.mxu0 0.0
        %1501 = vmatpush1.msra.mxu0 0.0
        %1502 = vmatprep.subr.mxu0 0.0
        %1503 = vmatpush1.msra.mxu0 0.0
        %1504 = vmatprep.subr.mxu0 0.0
        %1505 = vmatpush1.msra.mxu0 0.0
        %1506 = vmatprep.subr.mxu0 0.0
        %1507 = vmatpush1.msra.mxu0 0.0
        %1508 = vmatprep.subr.mxu0 0.0
        %1509 = vmatpush1.msra.mxu0 0.0
        %1510 = vmatprep.subr.mxu0 0.0
        %1511 = vmatpush1.msra.mxu0 0.0
        %1512 = vmatprep.subr.mxu0 0.0
        %1513 = vmatpush1.msra.mxu0 0.0
        %1514 = vmatprep.subr.mxu0 0.0
        %1515 = vmatpush1.msra.mxu0 0.0
        %1516 = vmatprep.subr.mxu0 0.0
        %1517 = vmatpush1.msra.mxu0 0.0
        %1518 = vmatprep.subr.mxu0 0.0
        %1519 = vmatpush1.msra.mxu0 0.0
        %1520 = vmatprep.subr.mxu0 0.0
        %1521 = vmatpush1.msra.mxu0 0.0
        %1522 = vmatprep.subr.mxu0 0.0
        %1523 = vmatpush1.msra.mxu0 0.0
        %1524 = vmatprep.subr.mxu0 0.0
        %1525 = vmatpush1.msra.mxu0 0.0
        %1526 = vmatprep.subr.mxu0 0.0
        %1527 = vmatpush1.msra.mxu0 0.0
        %1528 = vmatprep.subr.mxu0 0.0
        %1529 = vmatpush1.msra.mxu0 0.0
        %1530 = vmatprep.subr.mxu0 0.0
        %1531 = vmatpush1.msra.mxu0 0.0
        %1532 = vmatprep.subr.mxu0 0.0
        %1533 = vmatpush1.msra.mxu0 0.0
        %1534 = vmatprep.subr.mxu0 0.0
        %1535 = vmatpush1.msra.mxu0 0.0
        %1536 = vmatprep.subr.mxu0 0.0
        %1537 = vmatpush1.msra.mxu0 0.0
        %1538 = vmatprep.subr.mxu0 0.0
        %1539 = vmatpush1.msra.mxu0 0.0
        %1540 = vmatprep.subr.mxu0 0.0
        %1541 = vmatpush1.msra.mxu0 0.0
        %1542 = vmatprep.subr.mxu0 0.0
        %1543 = vmatpush1.msra.mxu0 0.0
        %1544 = vmatprep.subr.mxu0 0.0
        %1545 = vmatpush1.msra.mxu0 0.0
        %1546 = vmatprep.subr.mxu0 0.0
        %1547 = vmatpush1.msra.mxu0 0.0
        %1548 = vmatprep.subr.mxu0 0.0
        %1549 = vmatpush1.msra.mxu0 0.0
        %1550 = vmatprep.mubr.f32.mxu0 0.0
        %1551 = vmatmul.mubr.f32.gmra.mrb[0].mxu0 %v1484
        %v1552 = vpop.f32.mrb[0].mxu0
        %v1553 = vadd.f32 0.0, %v1552
        %v1554 = vpop.f32.mrb[0].mxu0
        %1555 = vdwg.mxu0
        %v1557 = vsel %vm1134, %v1480, 0
        %1559 = vmatprep.subr.mxu0 0.0
        %1560 = vmatpush1.msra.mxu0 %v1124
        %1561 = vmatprep.subr.mxu0 0.0
        %1562 = vmatpush1.msra.mxu0 0.0
        %1563 = vmatprep.subr.mxu0 0.0
        %1564 = vmatpush1.msra.mxu0 0.0
        %1565 = vmatprep.subr.mxu0 0.0
        %1566 = vmatpush1.msra.mxu0 0.0
        %1567 = vmatprep.subr.mxu0 0.0
        %1568 = vmatpush1.msra.mxu0 0.0
        %1569 = vmatprep.subr.mxu0 0.0
        %1570 = vmatpush1.msra.mxu0 0.0
        %1571 = vmatprep.subr.mxu0 0.0
        %1572 = vmatpush1.msra.mxu0 0.0
        %1573 = vmatprep.subr.mxu0 0.0
        %1574 = vmatpush1.msra.mxu0 0.0
        %1575 = vmatprep.subr.mxu0 0.0
        %1576 = vmatpush1.msra.mxu0 0.0
        %1577 = vmatprep.subr.mxu0 0.0
        %1578 = vmatpush1.msra.mxu0 0.0
        %1579 = vmatprep.subr.mxu0 0.0
        %1580 = vmatpush1.msra.mxu0 0.0
        %1581 = vmatprep.subr.mxu0 0.0
        %1582 = vmatpush1.msra.mxu0 0.0
        %1583 = vmatprep.subr.mxu0 0.0
        %1584 = vmatpush1.msra.mxu0 0.0
        %1585 = vmatprep.subr.mxu0 0.0
        %1586 = vmatpush1.msra.mxu0 0.0
        %1587 = vmatprep.subr.mxu0 0.0
        %1588 = vmatpush1.msra.mxu0 0.0
        %1589 = vmatprep.subr.mxu0 0.0
        %1590 = vmatpush1.msra.mxu0 0.0
        %1591 = vmatprep.subr.mxu0 0.0
        %1592 = vmatpush1.msra.mxu0 0.0
        %1593 = vmatprep.subr.mxu0 0.0
        %1594 = vmatpush1.msra.mxu0 0.0
        %1595 = vmatprep.subr.mxu0 0.0
        %1596 = vmatpush1.msra.mxu0 0.0
        %1597 = vmatprep.subr.mxu0 0.0
        %1598 = vmatpush1.msra.mxu0 0.0
        %1599 = vmatprep.subr.mxu0 0.0
        %1600 = vmatpush1.msra.mxu0 0.0
        %1601 = vmatprep.subr.mxu0 0.0
        %1602 = vmatpush1.msra.mxu0 0.0
        %1603 = vmatprep.subr.mxu0 0.0
        %1604 = vmatpush1.msra.mxu0 0.0
        %1605 = vmatprep.subr.mxu0 0.0
        %1606 = vmatpush1.msra.mxu0 0.0
        %1607 = vmatprep.subr.mxu0 0.0
        %1608 = vmatpush1.msra.mxu0 0.0
        %1609 = vmatprep.subr.mxu0 0.0
        %1610 = vmatpush1.msra.mxu0 0.0
        %1611 = vmatprep.subr.mxu0 0.0
        %1612 = vmatpush1.msra.mxu0 0.0
        %1613 = vmatprep.subr.mxu0 0.0
        %1614 = vmatpush1.msra.mxu0 0.0
        %1615 = vmatprep.subr.mxu0 0.0
        %1616 = vmatpush1.msra.mxu0 0.0
        %1617 = vmatprep.subr.mxu0 0.0
        %1618 = vmatpush1.msra.mxu0 0.0
        %1619 = vmatprep.subr.mxu0 0.0
        %1620 = vmatpush1.msra.mxu0 0.0
        %1621 = vmatprep.subr.mxu0 0.0
        %1622 = vmatpush1.msra.mxu0 0.0
        %1623 = vmatprep.mubr.f32.mxu0 0.0
        %1624 = vmatmul.mubr.f32.gmra.mrb[0].mxu0 %v1557
        %v1625 = vpop.f32.mrb[0].mxu0
        %v1626 = vadd.f32 0.0, %v1625
        %v1627 = vpop.f32.mrb[0].mxu0
        %1628 = vdwg.mxu0
        %v1630 = vsel %vm1134, %v1481, 0
        %1632 = vmatprep.subr.mxu0 0.0
        %1633 = vmatpush1.msra.mxu0 %v1125
        %1634 = vmatprep.subr.mxu0 0.0
        %1635 = vmatpush1.msra.mxu0 0.0
        %1636 = vmatprep.subr.mxu0 0.0
        %1637 = vmatpush1.msra.mxu0 0.0
        %1638 = vmatprep.subr.mxu0 0.0
        %1639 = vmatpush1.msra.mxu0 0.0
        %1640 = vmatprep.subr.mxu0 0.0
        %1641 = vmatpush1.msra.mxu0 0.0
        %1642 = vmatprep.subr.mxu0 0.0
        %1643 = vmatpush1.msra.mxu0 0.0
        %1644 = vmatprep.subr.mxu0 0.0
        %1645 = vmatpush1.msra.mxu0 0.0
        %1646 = vmatprep.subr.mxu0 0.0
        %1647 = vmatpush1.msra.mxu0 0.0
        %1648 = vmatprep.subr.mxu0 0.0
        %1649 = vmatpush1.msra.mxu0 0.0
        %1650 = vmatprep.subr.mxu0 0.0
        %1651 = vmatpush1.msra.mxu0 0.0
        %1652 = vmatprep.subr.mxu0 0.0
        %1653 = vmatpush1.msra.mxu0 0.0
        %1654 = vmatprep.subr.mxu0 0.0
        %1655 = vmatpush1.msra.mxu0 0.0
        %1656 = vmatprep.subr.mxu0 0.0
        %1657 = vmatpush1.msra.mxu0 0.0
        %1658 = vmatprep.subr.mxu0 0.0
        %1659 = vmatpush1.msra.mxu0 0.0
        %1660 = vmatprep.subr.mxu0 0.0
        %1661 = vmatpush1.msra.mxu0 0.0
        %1662 = vmatprep.subr.mxu0 0.0
        %1663 = vmatpush1.msra.mxu0 0.0
        %1664 = vmatprep.subr.mxu0 0.0
        %1665 = vmatpush1.msra.mxu0 0.0
        %1666 = vmatprep.subr.mxu0 0.0
        %1667 = vmatpush1.msra.mxu0 0.0
        %1668 = vmatprep.subr.mxu0 0.0
        %1669 = vmatpush1.msra.mxu0 0.0
        %1670 = vmatprep.subr.mxu0 0.0
        %1671 = vmatpush1.msra.mxu0 0.0
        %1672 = vmatprep.subr.mxu0 0.0
        %1673 = vmatpush1.msra.mxu0 0.0
        %1674 = vmatprep.subr.mxu0 0.0
        %1675 = vmatpush1.msra.mxu0 0.0
        %1676 = vmatprep.subr.mxu0 0.0
        %1677 = vmatpush1.msra.mxu0 0.0
        %1678 = vmatprep.subr.mxu0 0.0
        %1679 = vmatpush1.msra.mxu0 0.0
        %1680 = vmatprep.subr.mxu0 0.0
        %1681 = vmatpush1.msra.mxu0 0.0
        %1682 = vmatprep.subr.mxu0 0.0
        %1683 = vmatpush1.msra.mxu0 0.0
        %1684 = vmatprep.subr.mxu0 0.0
        %1685 = vmatpush1.msra.mxu0 0.0
        %1686 = vmatprep.subr.mxu0 0.0
        %1687 = vmatpush1.msra.mxu0 0.0
        %1688 = vmatprep.subr.mxu0 0.0
        %1689 = vmatpush1.msra.mxu0 0.0
        %1690 = vmatprep.subr.mxu0 0.0
        %1691 = vmatpush1.msra.mxu0 0.0
        %1692 = vmatprep.subr.mxu0 0.0
        %1693 = vmatpush1.msra.mxu0 0.0
        %1694 = vmatprep.subr.mxu0 0.0
        %1695 = vmatpush1.msra.mxu0 0.0
        %1696 = vmatprep.mubr.f32.mxu0 0.0
        %1697 = vmatmul.mubr.f32.gmra.mrb[0].mxu0 %v1630
        %v1698 = vpop.f32.mrb[0].mxu0
        %v1699 = vadd.f32 0.0, %v1698
        %v1700 = vpop.f32.mrb[0].mxu0
        %1701 = vdwg.mxu0
        %v1703 = vsel %vm1134, %v1482, 0
        %1705 = vmatprep.subr.mxu0 0.0
        %1706 = vmatpush1.msra.mxu0 %v1126
        %1707 = vmatprep.subr.mxu0 0.0
        %1708 = vmatpush1.msra.mxu0 0.0
        %1709 = vmatprep.subr.mxu0 0.0
        %1710 = vmatpush1.msra.mxu0 0.0
        %1711 = vmatprep.subr.mxu0 0.0
        %1712 = vmatpush1.msra.mxu0 0.0
        %1713 = vmatprep.subr.mxu0 0.0
        %1714 = vmatpush1.msra.mxu0 0.0
        %1715 = vmatprep.subr.mxu0 0.0
        %1716 = vmatpush1.msra.mxu0 0.0
        %1717 = vmatprep.subr.mxu0 0.0
        %1718 = vmatpush1.msra.mxu0 0.0
        %1719 = vmatprep.subr.mxu0 0.0
        %1720 = vmatpush1.msra.mxu0 0.0
        %1721 = vmatprep.subr.mxu0 0.0
        %1722 = vmatpush1.msra.mxu0 0.0
        %1723 = vmatprep.subr.mxu0 0.0
        %1724 = vmatpush1.msra.mxu0 0.0
        %1725 = vmatprep.subr.mxu0 0.0
        %1726 = vmatpush1.msra.mxu0 0.0
        %1727 = vmatprep.subr.mxu0 0.0
        %1728 = vmatpush1.msra.mxu0 0.0
        %1729 = vmatprep.subr.mxu0 0.0
        %1730 = vmatpush1.msra.mxu0 0.0
        %1731 = vmatprep.subr.mxu0 0.0
        %1732 = vmatpush1.msra.mxu0 0.0
        %1733 = vmatprep.subr.mxu0 0.0
        %1734 = vmatpush1.msra.mxu0 0.0
        %1735 = vmatprep.subr.mxu0 0.0
        %1736 = vmatpush1.msra.mxu0 0.0
        %1737 = vmatprep.subr.mxu0 0.0
        %1738 = vmatpush1.msra.mxu0 0.0
        %1739 = vmatprep.subr.mxu0 0.0
        %1740 = vmatpush1.msra.mxu0 0.0
        %1741 = vmatprep.subr.mxu0 0.0
        %1742 = vmatpush1.msra.mxu0 0.0
        %1743 = vmatprep.subr.mxu0 0.0
        %1744 = vmatpush1.msra.mxu0 0.0
        %1745 = vmatprep.subr.mxu0 0.0
        %1746 = vmatpush1.msra.mxu0 0.0
        %1747 = vmatprep.subr.mxu0 0.0
        %1748 = vmatpush1.msra.mxu0 0.0
        %1749 = vmatprep.subr.mxu0 0.0
        %1750 = vmatpush1.msra.mxu0 0.0
        %1751 = vmatprep.subr.mxu0 0.0
        %1752 = vmatpush1.msra.mxu0 0.0
        %1753 = vmatprep.subr.mxu0 0.0
        %1754 = vmatpush1.msra.mxu0 0.0
        %1755 = vmatprep.subr.mxu0 0.0
        %1756 = vmatpush1.msra.mxu0 0.0
        %1757 = vmatprep.subr.mxu0 0.0
        %1758 = vmatpush1.msra.mxu0 0.0
        %1759 = vmatprep.subr.mxu0 0.0
        %1760 = vmatpush1.msra.mxu0 0.0
        %1761 = vmatprep.subr.mxu0 0.0
        %1762 = vmatpush1.msra.mxu0 0.0
        %1763 = vmatprep.subr.mxu0 0.0
        %1764 = vmatpush1.msra.mxu0 0.0
        %1765 = vmatprep.subr.mxu0 0.0
        %1766 = vmatpush1.msra.mxu0 0.0
        %1767 = vmatprep.subr.mxu0 0.0
        %1768 = vmatpush1.msra.mxu0 0.0
        %1769 = vmatprep.mubr.f32.mxu0 0.0
        %1770 = vmatmul.mubr.f32.gmra.mrb[0].mxu0 %v1703
        %v1771 = vpop.f32.mrb[0].mxu0
        %v1772 = vadd.f32 0.0, %v1771
        %v1773 = vpop.f32.mrb[0].mxu0
        %1774 = vdwg.mxu0
        %v1775 = vcombine.low %v1553, %v1699
        %v1776 = vcombine.high %v1553, %v1699
        %v1778 = vunpack.c.l.s4 1983009808
        %v1779 = vunpack.c.0.s8 %v1778
        %v1780 = vlaneseq
        %v1781 = vshrl.u32 %v1780, 7
        %v1782 = vsub.s32 %v1779, %v1781
        %v1783 = vrot.slane %v1775, %v1782
        %v1785 = vunpack.c.l.s4 1983009808
        %v1786 = vunpack.c.0.s8 %v1785
        %v1787 = vlaneseq
        %v1788 = vshrl.u32 %v1787, 7
        %v1789 = vsub.s32 %v1786, %v1788
        %v1790 = vrot.slane %v1776, %v1789
        %v1791 = vcombine.low %v1626, %v1772
        %v1792 = vcombine.high %v1626, %v1772
        %v1794 = vunpack.c.l.s4 1983009808
        %v1795 = vunpack.c.0.s8 %v1794
        %v1796 = vlaneseq
        %v1797 = vshrl.u32 %v1796, 7
        %v1798 = vsub.s32 %v1795, %v1797
        %v1799 = vrot.slane %v1791, %v1798
        %v1801 = vunpack.c.l.s4 1983009808
        %v1802 = vunpack.c.0.s8 %v1801
        %v1803 = vlaneseq
        %v1804 = vshrl.u32 %v1803, 7
        %v1805 = vsub.s32 %v1802, %v1804
        %v1806 = vrot.slane %v1792, %v1805
        %v1807 = vcombine.low %v1783, %v1799
        %v1808 = vcombine.high %v1783, %v1799
        %v1810 = vunpack.c.l.s4 1934713408
        %v1811 = vunpack.c.0.s8 %v1810
        %v1812 = vlaneseq
        %v1813 = vshrl.u32 %v1812, 7
        %v1814 = vsub.s32 %v1811, %v1813
        %v1815 = vrot.slane %v1807, %v1814
        %v1817 = vunpack.c.l.s4 1934713408
        %v1818 = vunpack.c.0.s8 %v1817
        %v1819 = vlaneseq
        %v1820 = vshrl.u32 %v1819, 7
        %v1821 = vsub.s32 %v1818, %v1820
        %v1822 = vrot.slane %v1808, %v1821
        %v1823 = vcombine.low %v1790, %v1806
        %v1824 = vcombine.high %v1790, %v1806
        %v1826 = vunpack.c.l.s4 1934713408
        %v1827 = vunpack.c.0.s8 %v1826
        %v1828 = vlaneseq
        %v1829 = vshrl.u32 %v1828, 7
        %v1830 = vsub.s32 %v1827, %v1829
        %v1831 = vrot.slane %v1823, %v1830
        %v1833 = vunpack.c.l.s4 1934713408
        %v1834 = vunpack.c.0.s8 %v1833
        %v1835 = vlaneseq
        %v1836 = vshrl.u32 %v1835, 7
        %v1837 = vsub.s32 %v1834, %v1836
        %v1838 = vrot.slane %v1824, %v1837
        %v1839 = vcombine.high %v1815, 0.0
        %v1840 = vcombine.high %v1822, 0.0
        %v1841 = vcombine.high %v1831, 0.0
        %v1842 = vcombine.high %v1838, 0.0
        %v1843 = vcombine.low %v1815, %v1822
        %v1845 = vunpack.c.l.s4 1983009808
        %v1846 = vunpack.c.0.s8 %v1845
        %v1847 = vlaneseq
        %v1848 = vshrl.u32 %v1847, 7
        %v1849 = vsub.s32 %v1846, %v1848
        %v1850 = vrot.slane %v1843, %v1849
        %v1851 = vcombine.low %v1839, %v1840
        %v1853 = vunpack.c.l.s4 1983009808
        %v1854 = vunpack.c.0.s8 %v1853
        %v1855 = vlaneseq
        %v1856 = vshrl.u32 %v1855, 7
        %v1857 = vsub.s32 %v1854, %v1856
        %v1858 = vrot.slane %v1851, %v1857
        %v1859 = vcombine.low %v1831, %v1838
        %v1861 = vunpack.c.l.s4 1983009808
        %v1862 = vunpack.c.0.s8 %v1861
        %v1863 = vlaneseq
        %v1864 = vshrl.u32 %v1863, 7
        %v1865 = vsub.s32 %v1862, %v1864
        %v1866 = vrot.slane %v1859, %v1865
        %v1867 = vcombine.low %v1841, %v1842
        %v1869 = vunpack.c.l.s4 1983009808
        %v1870 = vunpack.c.0.s8 %v1869
        %v1871 = vlaneseq
        %v1872 = vshrl.u32 %v1871, 7
        %v1873 = vsub.s32 %v1870, %v1872
        %v1874 = vrot.slane %v1867, %v1873
        %v1875 = vcombine.low %v1850, %v1858
        %v1876 = vcombine.high %v1850, %v1858
        %v1878 = vunpack.c.l.s4 1934713408
        %v1879 = vunpack.c.0.s8 %v1878
        %v1880 = vlaneseq
        %v1881 = vshrl.u32 %v1880, 7
        %v1882 = vsub.s32 %v1879, %v1881
        %v1883 = vrot.slane %v1875, %v1882
        %v1885 = vunpack.c.l.s4 1934713408
        %v1886 = vunpack.c.0.s8 %v1885
        %v1887 = vlaneseq
        %v1888 = vshrl.u32 %v1887, 7
        %v1889 = vsub.s32 %v1886, %v1888
        %v1890 = vrot.slane %v1876, %v1889
        %v1891 = vcombine.low %v1866, %v1874
        %v1892 = vcombine.high %v1866, %v1874
        %v1894 = vunpack.c.l.s4 1934713408
        %v1895 = vunpack.c.0.s8 %v1894
        %v1896 = vlaneseq
        %v1897 = vshrl.u32 %v1896, 7
        %v1898 = vsub.s32 %v1895, %v1897
        %v1899 = vrot.slane %v1891, %v1898
        %v1901 = vunpack.c.l.s4 1934713408
        %v1902 = vunpack.c.0.s8 %v1901
        %v1903 = vlaneseq
        %v1904 = vshrl.u32 %v1903, 7
        %v1905 = vsub.s32 %v1902, %v1904
        %v1906 = vrot.slane %v1892, %v1905
        %v1907 = vcombine.low %v1883, %v1899
        %v1908 = vcombine.high %v1883, %v1899
        %v1909 = vcombine.low %v1890, %v1906
        %v1910 = vcombine.high %v1890, %v1906
        %1912 = vrot.lane.b32.xlu0 %v1908, 8
        %v1913 = vpop.permute.xlu0 %1912
        %1916 = vrot.lane.b32.xlu0 %v1909, 16
        %v1917 = vpop.permute.xlu0 %1916
        %1920 = vrot.lane.b32.xlu0 %v1910, 24
        %v1921 = vpop.permute.xlu0 %1920
        %v1923 = vsel %vm1134, %v1907, %v1913
        %vm1924 = vcmask 130048
        %v1925 = vsel %vm1924, %v1923, %v1917
        %vm1926 = vcmask 195584
        %v1927 = vsel %vm1926, %v1925, %v1921
        %v1928 = vld [vmem:[#allocation14] sm:$0xff]
        %v1929 = vld [vmem:[#allocation14 + $0x8] sm:$0xff]
        %v1930 = vld [vmem:[#allocation14 + $0x10] sm:$0xff]
        %v1931 = vld [vmem:[#allocation14 + $0x18] sm:$0xff]
        %v1932 = vld [vmem:[#allocation15] sm:$0x1]
        %v1934 = vlaneseq
        %v1935 = vshrl.u32 %v1934, 7
        %v1936 = vsub.s32 0, %v1935
        %v1937 = vrot.slane %v1932, %v1936
        %v1940 = vsel %vm643, %v1927, 0
        %1942 = vmatprep.subr.mxu0 0.0
        %1943 = vmatpush1.msra.mxu0 %v1928
        %1944 = vmatprep.subr.mxu0 0.0
        %1945 = vmatpush1.msra.mxu0 %v1929
        %1946 = vmatprep.subr.mxu0 0.0
        %1947 = vmatpush1.msra.mxu0 %v1930
        %1948 = vmatprep.subr.mxu0 0.0
        %1949 = vmatpush1.msra.mxu0 %v1931
        %1950 = vmatprep.subr.mxu0 0.0
        %1951 = vmatpush1.msra.mxu0 0.0
        %1952 = vmatprep.subr.mxu0 0.0
        %1953 = vmatpush1.msra.mxu0 0.0
        %1954 = vmatprep.subr.mxu0 0.0
        %1955 = vmatpush1.msra.mxu0 0.0
        %1956 = vmatprep.subr.mxu0 0.0
        %1957 = vmatpush1.msra.mxu0 0.0
        %1958 = vmatprep.subr.mxu0 0.0
        %1959 = vmatpush1.msra.mxu0 0.0
        %1960 = vmatprep.subr.mxu0 0.0
        %1961 = vmatpush1.msra.mxu0 0.0
        %1962 = vmatprep.subr.mxu0 0.0
        %1963 = vmatpush1.msra.mxu0 0.0
        %1964 = vmatprep.subr.mxu0 0.0
        %1965 = vmatpush1.msra.mxu0 0.0
        %1966 = vmatprep.subr.mxu0 0.0
        %1967 = vmatpush1.msra.mxu0 0.0
        %1968 = vmatprep.subr.mxu0 0.0
        %1969 = vmatpush1.msra.mxu0 0.0
        %1970 = vmatprep.subr.mxu0 0.0
        %1971 = vmatpush1.msra.mxu0 0.0
        %1972 = vmatprep.subr.mxu0 0.0
        %1973 = vmatpush1.msra.mxu0 0.0
        %1974 = vmatprep.subr.mxu0 0.0
        %1975 = vmatpush1.msra.mxu0 0.0
        %1976 = vmatprep.subr.mxu0 0.0
        %1977 = vmatpush1.msra.mxu0 0.0
        %1978 = vmatprep.subr.mxu0 0.0
        %1979 = vmatpush1.msra.mxu0 0.0
        %1980 = vmatprep.subr.mxu0 0.0
        %1981 = vmatpush1.msra.mxu0 0.0
        %1982 = vmatprep.subr.mxu0 0.0
        %1983 = vmatpush1.msra.mxu0 0.0
        %1984 = vmatprep.subr.mxu0 0.0
        %1985 = vmatpush1.msra.mxu0 0.0
        %1986 = vmatprep.subr.mxu0 0.0
        %1987 = vmatpush1.msra.mxu0 0.0
        %1988 = vmatprep.subr.mxu0 0.0
        %1989 = vmatpush1.msra.mxu0 0.0
        %1990 = vmatprep.subr.mxu0 0.0
        %1991 = vmatpush1.msra.mxu0 0.0
        %1992 = vmatprep.subr.mxu0 0.0
        %1993 = vmatpush1.msra.mxu0 0.0
        %1994 = vmatprep.subr.mxu0 0.0
        %1995 = vmatpush1.msra.mxu0 0.0
        %1996 = vmatprep.subr.mxu0 0.0
        %1997 = vmatpush1.msra.mxu0 0.0
        %1998 = vmatprep.subr.mxu0 0.0
        %1999 = vmatpush1.msra.mxu0 0.0
        %2000 = vmatprep.subr.mxu0 0.0
        %2001 = vmatpush1.msra.mxu0 0.0
        %2002 = vmatprep.subr.mxu0 0.0
        %2003 = vmatpush1.msra.mxu0 0.0
        %2004 = vmatprep.subr.mxu0 0.0
        %2005 = vmatpush1.msra.mxu0 0.0
        %2006 = vmatprep.mubr.f32.mxu0 0.0
        %2007 = vmatmul.mubr.f32.gmra.mrb[0].mxu0 %v1940
        %v2008 = vpop.f32.mrb[0].mxu0
        %v2009 = vadd.f32 %v1937, %v2008
        %v2010 = vpop.f32.mrb[0].mxu0
        %2011 = vdwg.mxu0
        %v2012 = vadd.f32 %v642, %v2009
        %v2013 = vsel %vm643, %v2012, 0.0
        %2014 = vadd.xlane.f32.xlu0 %v2013
        %v2015 = vpop.xlane.xlu0 %2014
        %v2016 = vmul.f32 %v2015, %v647
        %v2017 = vsub.f32 %v2012, %v2016
        %v2018 = vmul.f32 %v2017, %v2017
        %v2019 = vsel %vm643, %v2018, 0.0
        %2020 = vadd.xlane.f32.xlu0 %v2019
        %v2021 = vpop.xlane.xlu0 %2020
        %v2022 = vmul.f32 %v2021, %v654
        %v2023 = vrsqrt.pop %v2022
        %v2024 = vmul.f32 %v2022, %v2023
        %vm2025 = vcmp.eq.f32.partialorder %v2022, inf
        %v2026 = vsel %vm2025, %v2022, %v2024
        %vm2027 = vcmp.eq.f32.partialorder %v2022, 0.0
        %v2028 = vand.u32 %v2022, 2147483648
        %v2029 = vsel %vm2027, %v2028, %v2026
        %v2030 = vadd.f32 %v2029, 1e-06
        %v2031 = vrcp.pop %v2030
        %v2032 = vmul.f32 %v665, %v2031
        %v2033 = vmul.f32 %v2032, %v2017
        %v2034 = vadd.f32 %v2033, %v668
        %v2035 = vld [vmem:[#allocation17] sm:$0xff]
        %v2036 = vld [vmem:[#allocation17 + $0x8] sm:$0xff]
        %v2037 = vld [vmem:[#allocation17 + $0x10] sm:$0xff]
        %v2038 = vld [vmem:[#allocation17 + $0x18] sm:$0xff]
        %v2039 = vld [vmem:[#allocation18] sm:$0x1]
        %v2041 = vlaneseq
        %v2042 = vshrl.u32 %v2041, 7
        %v2043 = vsub.s32 0, %v2042
        %v2044 = vrot.slane %v2039, %v2043
        %v2047 = vsel %vm643, %v2034, 0
        %2049 = vmatprep.subr.mxu0 0.0
        %2050 = vmatpush1.msra.mxu0 %v2035
        %2051 = vmatprep.subr.mxu0 0.0
        %2052 = vmatpush1.msra.mxu0 %v2036
        %2053 = vmatprep.subr.mxu0 0.0
        %2054 = vmatpush1.msra.mxu0 %v2037
        %2055 = vmatprep.subr.mxu0 0.0
        %2056 = vmatpush1.msra.mxu0 %v2038
        %2057 = vmatprep.subr.mxu0 0.0
        %2058 = vmatpush1.msra.mxu0 0.0
        %2059 = vmatprep.subr.mxu0 0.0
        %2060 = vmatpush1.msra.mxu0 0.0
        %2061 = vmatprep.subr.mxu0 0.0
        %2062 = vmatpush1.msra.mxu0 0.0
        %2063 = vmatprep.subr.mxu0 0.0
        %2064 = vmatpush1.msra.mxu0 0.0
        %2065 = vmatprep.subr.mxu0 0.0
        %2066 = vmatpush1.msra.mxu0 0.0
        %2067 = vmatprep.subr.mxu0 0.0
        %2068 = vmatpush1.msra.mxu0 0.0
        %2069 = vmatprep.subr.mxu0 0.0
        %2070 = vmatpush1.msra.mxu0 0.0
        %2071 = vmatprep.subr.mxu0 0.0
        %2072 = vmatpush1.msra.mxu0 0.0
        %2073 = vmatprep.subr.mxu0 0.0
        %2074 = vmatpush1.msra.mxu0 0.0
        %2075 = vmatprep.subr.mxu0 0.0
        %2076 = vmatpush1.msra.mxu0 0.0
        %2077 = vmatprep.subr.mxu0 0.0
        %2078 = vmatpush1.msra.mxu0 0.0
        %2079 = vmatprep.subr.mxu0 0.0
        %2080 = vmatpush1.msra.mxu0 0.0
        %2081 = vmatprep.subr.mxu0 0.0
        %2082 = vmatpush1.msra.mxu0 0.0
        %2083 = vmatprep.subr.mxu0 0.0
        %2084 = vmatpush1.msra.mxu0 0.0
        %2085 = vmatprep.subr.mxu0 0.0
        %2086 = vmatpush1.msra.mxu0 0.0
        %2087 = vmatprep.subr.mxu0 0.0
        %2088 = vmatpush1.msra.mxu0 0.0
        %2089 = vmatprep.subr.mxu0 0.0
        %2090 = vmatpush1.msra.mxu0 0.0
        %2091 = vmatprep.subr.mxu0 0.0
        %2092 = vmatpush1.msra.mxu0 0.0
        %2093 = vmatprep.subr.mxu0 0.0
        %2094 = vmatpush1.msra.mxu0 0.0
        %2095 = vmatprep.subr.mxu0 0.0
        %2096 = vmatpush1.msra.mxu0 0.0
        %2097 = vmatprep.subr.mxu0 0.0
        %2098 = vmatpush1.msra.mxu0 0.0
        %2099 = vmatprep.subr.mxu0 0.0
        %2100 = vmatpush1.msra.mxu0 0.0
        %2101 = vmatprep.subr.mxu0 0.0
        %2102 = vmatpush1.msra.mxu0 0.0
        %2103 = vmatprep.subr.mxu0 0.0
        %2104 = vmatpush1.msra.mxu0 0.0
        %2105 = vmatprep.subr.mxu0 0.0
        %2106 = vmatpush1.msra.mxu0 0.0
        %2107 = vmatprep.subr.mxu0 0.0
        %2108 = vmatpush1.msra.mxu0 0.0
        %2109 = vmatprep.subr.mxu0 0.0
        %2110 = vmatpush1.msra.mxu0 0.0
        %2111 = vmatprep.subr.mxu0 0.0
        %2112 = vmatpush1.msra.mxu0 0.0
        %2113 = vmatprep.mubr.f32.mxu0 0.0
        %2114 = vmatmul.mubr.f32.gmra.mrb[0].mxu0 %v2047
        %v2115 = vpop.f32.mrb[0].mxu0
        %v2116 = vadd.f32 %v2044, %v2115
        %v2117 = vpop.f32.mrb[0].mxu0
        %2118 = vdwg.mxu0
        %v2119 = vmax.f32 %v2116, 0.0
        %v2120 = vld [vmem:[#allocation20] sm:$0xff]
        %v2121 = vld [vmem:[#allocation20 + $0x8] sm:$0xff]
        %v2122 = vld [vmem:[#allocation20 + $0x10] sm:$0xff]
        %v2123 = vld [vmem:[#allocation20 + $0x18] sm:$0xff]
        %v2124 = vld [vmem:[#allocation20 + $0x20] sm:$0xff]
        %v2125 = vld [vmem:[#allocation20 + $0x28] sm:$0xff]
        %v2126 = vld [vmem:[#allocation20 + $0x30] sm:$0xff]
        %v2127 = vld [vmem:[#allocation20 + $0x38] sm:$0xff]
        %v2128 = vld [vmem:[#allocation21] sm:$0x1]
        %v2130 = vlaneseq
        %v2131 = vshrl.u32 %v2130, 7
        %v2132 = vsub.s32 0, %v2131
        %v2133 = vrot.slane %v2128, %v2132
        %vm2135 = vcmask 523264
        %v2137 = vsel %vm2135, %v2119, 0
        %2139 = vmatprep.subr.mxu0 0.0
        %2140 = vmatpush1.msra.mxu0 %v2120
        %2141 = vmatprep.subr.mxu0 0.0
        %2142 = vmatpush1.msra.mxu0 %v2121
        %2143 = vmatprep.subr.mxu0 0.0
        %2144 = vmatpush1.msra.mxu0 %v2122
        %2145 = vmatprep.subr.mxu0 0.0
        %2146 = vmatpush1.msra.mxu0 %v2123
        %2147 = vmatprep.subr.mxu0 0.0
        %2148 = vmatpush1.msra.mxu0 %v2124
        %2149 = vmatprep.subr.mxu0 0.0
        %2150 = vmatpush1.msra.mxu0 %v2125
        %2151 = vmatprep.subr.mxu0 0.0
        %2152 = vmatpush1.msra.mxu0 %v2126
        %2153 = vmatprep.subr.mxu0 0.0
        %2154 = vmatpush1.msra.mxu0 %v2127
        %2155 = vmatprep.subr.mxu0 0.0
        %2156 = vmatpush1.msra.mxu0 0.0
        %2157 = vmatprep.subr.mxu0 0.0
        %2158 = vmatpush1.msra.mxu0 0.0
        %2159 = vmatprep.subr.mxu0 0.0
        %2160 = vmatpush1.msra.mxu0 0.0
        %2161 = vmatprep.subr.mxu0 0.0
        %2162 = vmatpush1.msra.mxu0 0.0
        %2163 = vmatprep.subr.mxu0 0.0
        %2164 = vmatpush1.msra.mxu0 0.0
        %2165 = vmatprep.subr.mxu0 0.0
        %2166 = vmatpush1.msra.mxu0 0.0
        %2167 = vmatprep.subr.mxu0 0.0
        %2168 = vmatpush1.msra.mxu0 0.0
        %2169 = vmatprep.subr.mxu0 0.0
        %2170 = vmatpush1.msra.mxu0 0.0
        %2171 = vmatprep.subr.mxu0 0.0
        %2172 = vmatpush1.msra.mxu0 0.0
        %2173 = vmatprep.subr.mxu0 0.0
        %2174 = vmatpush1.msra.mxu0 0.0
        %2175 = vmatprep.subr.mxu0 0.0
        %2176 = vmatpush1.msra.mxu0 0.0
        %2177 = vmatprep.subr.mxu0 0.0
        %2178 = vmatpush1.msra.mxu0 0.0
        %2179 = vmatprep.subr.mxu0 0.0
        %2180 = vmatpush1.msra.mxu0 0.0
        %2181 = vmatprep.subr.mxu0 0.0
        %2182 = vmatpush1.msra.mxu0 0.0
        %2183 = vmatprep.subr.mxu0 0.0
        %2184 = vmatpush1.msra.mxu0 0.0
        %2185 = vmatprep.subr.mxu0 0.0
        %2186 = vmatpush1.msra.mxu0 0.0
        %2187 = vmatprep.subr.mxu0 0.0
        %2188 = vmatpush1.msra.mxu0 0.0
        %2189 = vmatprep.subr.mxu0 0.0
        %2190 = vmatpush1.msra.mxu0 0.0
        %2191 = vmatprep.subr.mxu0 0.0
        %2192 = vmatpush1.msra.mxu0 0.0
        %2193 = vmatprep.subr.mxu0 0.0
        %2194 = vmatpush1.msra.mxu0 0.0
        %2195 = vmatprep.subr.mxu0 0.0
        %2196 = vmatpush1.msra.mxu0 0.0
        %2197 = vmatprep.subr.mxu0 0.0
        %2198 = vmatpush1.msra.mxu0 0.0
        %2199 = vmatprep.subr.mxu0 0.0
        %2200 = vmatpush1.msra.mxu0 0.0
        %2201 = vmatprep.subr.mxu0 0.0
        %2202 = vmatpush1.msra.mxu0 0.0
        %2203 = vmatprep.mubr.f32.mxu0 0.0
        %2204 = vmatmul.mubr.f32.gmra.mrb[0].mxu0 %v2137
        %v2205 = vpop.f32.mrb[0].mxu0
        %v2206 = vadd.f32 %v2133, %v2205
        %v2207 = vpop.f32.mrb[0].mxu0
        %2208 = vdwg.mxu0
        %v2209 = vadd.f32 %v2012, %v2206
        %2210 = vst.msk [vmem:[%s639] sm:$0xff] %vm643, %v2209
        %s2211 = sand.u32 %s330, 1
        %s2212 = scalar_lea.sflag [#allocation4], %s2211
        %s2213 = sand.u32 %s330, 1
        %s2214 = smul.addr %s2213, 8
        %s2215 = scalar_lea.vmem [#allocation24], %s2214
        // Predicated region
        $region125: #{tpu_custom_call.1} parent=71 // pred_check
          %p2216 = pneg %p340
        $region126: #{tpu_custom_call.1} parent=71 // pred_check_branch
          %2218 = sbr.rel (%p2216) target = $region128
        $region127: #{tpu_custom_call.1} parent=71 // pred_region
          %s2220 = ssub.s32 128, 128
          %2221 = vsyncadd %s2212, %s2220
          %s2222 = smul.addr %s39, 128
          %s2223 = scalar_lea.hbm %s13, %s2222
          %s2225 = sshll.u32 %s2215, 4
          %s2226 = int_to_ptr.vmem [resolvable:$true] %s2225
          %2228 = dma.vmem_to_hbm [thread:$0]  %s2226, 128, %s2223, %s2212
        $region128: #{tpu_custom_call.1} parent=71 // pred_fallthru
          _
      $region72: #{tpu_custom_call.1} parent=5 // pred_fallthru
        _
      %p2229 = scmp.le.s32.totalorder 2, %s34
      // Predicated region
      $region129: #{tpu_custom_call.1} parent=5 // pred_check
        %p2230 = pneg %p2229
      $region130: #{tpu_custom_call.1} parent=5 // pred_check_branch
        %2232 = sbr.rel (%p2230) target = $region132
      $region131: #{tpu_custom_call.1} parent=5 // pred_region
        %s2233 = ssub.s32 %s34, 2
        // Predicated region
        $region133: #{tpu_custom_call.1} parent=131 // pred_check
          %p2234 = pneg %p346
        $region134: #{tpu_custom_call.1} parent=131 // pred_check_branch
          %2236 = sbr.rel (%p2234) target = $region136
        $region135: #{tpu_custom_call.1} parent=131 // pred_region
          %s2237 = sand.u32 %s331, 1
          %s2238 = scalar_lea.sflag [#allocation4], %s2237
          %s2239 = sand.u32 %s331, 1
          %s2240 = smul.addr %s2239, 8
          %s2241 = scalar_lea.vmem [#allocation24], %s2240
          %2242 = dma.done %s2238, 128
        $region136: #{tpu_custom_call.1} parent=131 // pred_fallthru
          _
      $region132: #{tpu_custom_call.1} parent=5 // pred_fallthru
        _
    $region6: #{tpu_custom_call.1} parent=1 // loop_footer
      %s38 = sadd.s32 1, %s34
    $region7: #{tpu_custom_call.1} parent=1 // loop_footer_branch
      %33 = sbr.rel target = $region3
    $region8: #{tpu_custom_call.1} parent=1 // loop_exit
      _
    %2243 = vsyncpa [#allocation3], 1
    %s2244 = scalar_lea.sflag [#allocation3], 1
    %2245 = vsyncpa %s2244, 1
    %2246 = vsyncpa [#allocation7], 1
    %s2247 = scalar_lea.sflag [#allocation7], 1
    %2248 = vsyncpa %s2247, 1
    %2249 = vsyncpa [#allocation10], 1
    %2250 = vsyncpa [#allocation13], 1
    %2251 = vsyncpa [#allocation16], 1
    %2252 = vsyncpa [#allocation19], 1
    %2253 = vsyncpa [#allocation22], 1
    %2254 = vsyncpa [#allocation4], 1
    %s2255 = scalar_lea.sflag [#allocation4], 1
    %2256 = vsyncpa %s2255, 1
    %2257 = vsyncpa [#allocation5], 1
    %s2258 = scalar_lea.sflag [#allocation5], 1
    %2259 = vsyncpa %s2258, 1

</llo_original>
